<compile_context>
chip_gen: v5e
topology: v5e:2x2
jax: 0.10.0
libtpu: 0.0.40
codegen_flags: <defaults>
</compile_context>

<pallas_src>
import functools

import jax
import jax.numpy as jnp
from jax.experimental import pallas as pl
from jax.experimental.pallas import tpu as pltpu


def _pma_kernel(avg_m_ref, x_ref, m_ref, *wb_and_out, num_layers):
    o_ref = wb_and_out[-1]
    wb = wb_and_out[:-1]

    avg_m = avg_m_ref[0, 0]                       # SMEM scalar
    x = x_ref[...].astype(jnp.float32)            # (TB, G, E)
    m = m_ref[...].astype(jnp.float32)            # (TB, 1)

    # --- aggregators over the group-member axis (dim=1): mean, max, min, std ---
    mean = jnp.mean(x, axis=1)                    # (TB, E)
    mx = jnp.max(x, axis=1)
    mn = jnp.min(x, axis=1)
    centered = x - mean[:, None, :]
    var = jnp.mean(centered * centered, axis=1)   # two-pass (population) variance
    std = jnp.sqrt(jnp.maximum(var, 0.0) + 1e-5)  # PNA convention: sqrt(relu(var)+eps)
    x_aggre = jnp.concatenate([mean, mx, mn, std], axis=1)        # (TB, 4E)

    # --- scalers: identity, amplification, attenuation (PNA convention) ---
    # Note: m == 0 would give att = inf, matching the original module's behavior.
    log_m = jnp.log(m + 1.0)                      # (TB, 1)
    amp = log_m / avg_m
    att = avg_m * pl.reciprocal(log_m, approx=False)   # EUP reciprocal, exact

    # --- MLP layer 0 with W0 split per scaler row-block (no (TB,12E) concat) ---
    four_e = 4 * x.shape[2]
    w0 = wb[0]                                    # ref, (12E, H): slice rows statically
    b0 = wb[1][...]
    h = jnp.dot(x_aggre, w0[0:four_e, :], preferred_element_type=jnp.float32)
    h = h + amp * jnp.dot(x_aggre, w0[four_e:2 * four_e, :],
                          preferred_element_type=jnp.float32)
    h = h + att * jnp.dot(x_aggre, w0[2 * four_e:3 * four_e, :],
                          preferred_element_type=jnp.float32)
    h = h + b0
    if num_layers > 1:
        h = jnp.maximum(h, 0.0)

    # --- remaining MLP layers: Linear (-> ReLU except last); dropout=0.0 no-op ---
    for li in range(1, num_layers):
        w = wb[2 * li][...]
        b = wb[2 * li + 1][...]
        h = jnp.dot(h, w, preferred_element_type=jnp.float32) + b
        if li < num_layers - 1:
            h = jnp.maximum(h, 0.0)

    o_ref[...] = h.astype(o_ref.dtype)


def _pick_batch_tile(B, G, E, out_dim, weights, biases,
                     target=1024, vmem_budget_bytes=24 << 20):
    """Largest batch tile that (a) divides B, (b) is a multiple of 8 when possible,
    (c) keeps double-buffered tiles + weights under a conservative VMEM budget
    (safe for v7x's smaller VMEM without touching vmem_limit_bytes), and
    (d) leaves >= 2 grid steps so v7x's two TensorCores both get work."""
    per_row = 2 * 4 * (G * E + 1 + out_dim)      # x + m + out, f32, double-buffered
    fixed = 2 * 4 * (sum(int(w.size) for w in weights) +
                     sum(int(b.size) for b in biases))
    cap = max(8, (vmem_budget_bytes - fixed) // max(per_row, 1))
    cap = min(cap, target, B)
    if B > 8:
        cap = min(cap, max(8, B // 2))           # keep at least 2 grid steps
    bt = (cap // 8) * 8
    while bt >= 8:                               # prefer multiples of 8 (f32 sublanes)
        if B % bt == 0:
            return int(bt)
        bt -= 8
    bt = min(cap, B)                             # fallback: any divisor of B
    while bt > 1 and B % bt != 0:
        bt -= 1
    return int(max(bt, 1))


def pma_layer(x, m, weights, biases, avg_m, *, batch_tile=None):
    """x: (B, G, E), m: (B, 1); weights[i]: (d_in_i, d_out_i); biases[i]: (1, d_out_i)."""
    B, G, E = x.shape
    num_layers = len(weights)
    out_dim = int(weights[-1].shape[1])

    if batch_tile is None:
        batch_tile = _pick_batch_tile(B, G, E, out_dim, weights, biases)
    assert B % batch_tile == 0, (B, batch_tile)
    grid = (B // batch_tile,)

    avg_m_arr = jnp.asarray(avg_m, dtype=jnp.float32).reshape(1, 1)

    in_specs = [
        pl.BlockSpec(memory_space=pltpu.MemorySpace.SMEM),        # avg_m scalar
        pl.BlockSpec((batch_tile, G, E), lambda i: (i, 0, 0)),    # x tile
        pl.BlockSpec((batch_tile, 1), lambda i: (i, 0)),          # m tile
    ]
    wb_args = []
    for w, b in zip(weights, biases):
        # Constant block index -> Pallas fetches these once and keeps them resident.
        in_specs.append(pl.BlockSpec(w.shape, lambda i: (0, 0)))
        in_specs.append(pl.BlockSpec(b.shape, lambda i: (0, 0)))
        wb_args += [w, b]

    # Advisory cost estimate for XLA's scheduler.
    itemsize = x.dtype.itemsize
    matmul_flops = 2 * B * sum(int(w.shape[0]) * int(w.shape[1]) for w in weights)
    reduce_flops = 6 * B * G * E
    bytes_accessed = (int(x.size) * itemsize + int(m.size) * m.dtype.itemsize
                      + sum(int(w.size) * w.dtype.itemsize for w in weights)
                      + sum(int(b.size) * b.dtype.itemsize for b in biases)
                      + B * out_dim * itemsize)
    cost = pl.CostEstimate(flops=int(matmul_flops + reduce_flops),
                           transcendentals=int(B * (E + 2)),
                           bytes_accessed=int(bytes_accessed))

    kernel = functools.partial(_pma_kernel, num_layers=num_layers)

    return pl.pallas_call(
        kernel,
        grid=grid,
        in_specs=in_specs,
        out_specs=pl.BlockSpec((batch_tile, out_dim), lambda i: (i, 0)),
        out_shape=jax.ShapeDtypeStruct((B, out_dim), x.dtype),
        compiler_params=pltpu.CompilerParams(dimension_semantics=("parallel",)),
        cost_estimate=cost,
    )(avg_m_arr, x, m, *wb_args)


def pma_reference(x, m, weights, biases, avg_m):
    """Pure-JAX reference of the same forward pass (for verification)."""
    mean = jnp.mean(x, axis=1)
    mx = jnp.max(x, axis=1)
    mn = jnp.min(x, axis=1)
    var = jnp.mean((x - mean[:, None, :]) ** 2, axis=1)
    std = jnp.sqrt(jnp.maximum(var, 0.0) + 1e-5)
    x_aggre = jnp.concatenate([mean, mx, mn, std], axis=1)
    log_m = jnp.log(m + 1.0)
    x_scale = jnp.concatenate(
        [x_aggre, x_aggre * (log_m / avg_m), x_aggre * (avg_m / log_m)], axis=1)
    h = x_scale
    for li, (w, b) in enumerate(zip(weights, biases)):
        h = h @ w + b
        if li < len(weights) - 1:
            h = jnp.maximum(h, 0.0)
    return h


if __name__ == "__main__":
    # Small shapes consistent with the module (multi-tile grid still exercised).
    B, G, E = 64, 8, 32                   # batch, group members, embed_size
    num_layers = 2                        # MLP depth
    aggregators = ["mean", "max", "min", "std"]
    scalers = ["identity", "amplification", "attenuation"]
    in_size = len(aggregators) * len(scalers) * E   # 12 * 32 = 384
    hidden = E
    out = E

    key = jax.random.PRNGKey(0)
    kx, km, kw, kb = jax.random.split(key, 4)

    x = jax.random.normal(kx, (B, G, E), dtype=jnp.float32)
    m = jax.random.randint(km, (B, 1), 1, G + 1).astype(jnp.float32)  # group sizes >= 1
    avg_m = float(jnp.mean(jnp.log(m + 1.0)))                         # self.avg_m analogue

    # Deterministic MLP parameter init (Linear layers: in -> hidden -> ... -> out).
    sizes = [in_size] + [hidden] * (num_layers - 1) + [out]
    wkeys = jax.random.split(kw, num_layers)
    bkeys = jax.random.split(kb, num_layers)
    weights, biases = [], []
    for li in range(num_layers):
        fan_in = sizes[li]
        w = jax.random.normal(wkeys[li], (sizes[li], sizes[li + 1]),
                              dtype=jnp.float32) / jnp.sqrt(float(fan_in))
        b = 0.01 * jax.random.normal(bkeys[li], (1, sizes[li + 1]), dtype=jnp.float32)
        weights.append(w)
        biases.append(b)

    y = pma_layer(x, m, weights, biases, avg_m)
    y = jax.block_until_ready(y)

    y_ref = pma_reference(x, m, weights, biases, avg_m)
    assert y.shape == (B, E)
    assert jnp.allclose(y, y_ref, atol=1e-4, rtol=1e-4), "mismatch vs reference"

    print("KERNEL_OK")
</pallas_src>

<mosaic_0001>
module attributes {stable_mosaic.version = 11 : i64} {
  func.func @_pma_kernel(%arg0: i32, %arg1: memref<1x1xf32, #tpu.memory_space<smem>>, %arg2: memref<32x8x32xf32, #tpu.memory_space<vmem>>, %arg3: memref<32x1xf32, #tpu.memory_space<vmem>>, %arg4: memref<384x32xf32, #tpu.memory_space<vmem>>, %arg5: memref<1x32xf32, #tpu.memory_space<vmem>>, %arg6: memref<32x32xf32, #tpu.memory_space<vmem>>, %arg7: memref<1x32xf32, #tpu.memory_space<vmem>>, %arg8: memref<32x32xf32, #tpu.memory_space<vmem>>) attributes {dimension_semantics = [#tpu.dimension_semantics<parallel>], iteration_bounds = array<i64: 2>, scalar_prefetch = 0 : i64, scratch_operands = 0 : i64, tpu.core_type = #tpu.core_type<tc>, window_params = [{transform_indices = @transform_0, window_bounds = array<i64: 1, 1>}, {transform_indices = @transform_1, window_bounds = array<i64: 32, 8, 32>}, {transform_indices = @transform_2, window_bounds = array<i64: 32, 1>}, {pipeline_mode = #tpu.pipeline_mode<synchronous>, transform_indices = @transform_3, window_bounds = array<i64: 384, 32>}, {pipeline_mode = #tpu.pipeline_mode<synchronous>, transform_indices = @transform_4, window_bounds = array<i64: 1, 32>}, {pipeline_mode = #tpu.pipeline_mode<synchronous>, transform_indices = @transform_5, window_bounds = array<i64: 32, 32>}, {pipeline_mode = #tpu.pipeline_mode<synchronous>, transform_indices = @transform_6, window_bounds = array<i64: 1, 32>}, {transform_indices = @transform_7, window_bounds = array<i64: 32, 32>}]} {
    %c0 = arith.constant 0 : index
    %c0_0 = arith.constant 0 : index
    %0 = memref.load %arg1[%c0, %c0_0] : memref<1x1xf32, #tpu.memory_space<smem>>
    %c0_1 = arith.constant 0 : index
    %c0_2 = arith.constant 0 : index
    %c0_3 = arith.constant 0 : index
    %1 = vector.load %arg2[%c0_1, %c0_2, %c0_3] : memref<32x8x32xf32, #tpu.memory_space<vmem>>, vector<32x8x32xf32>
    %c0_4 = arith.constant 0 : index
    %c0_5 = arith.constant 0 : index
    %2 = vector.load %arg3[%c0_4, %c0_5] : memref<32x1xf32, #tpu.memory_space<vmem>>, vector<32x1xf32>
    %cst = arith.constant dense<0.000000e+00> : vector<32x32xf32>
    %3 = vector.multi_reduction <add>, %1, %cst [1] : vector<32x8x32xf32> to vector<32x32xf32>
    %cst_6 = arith.constant 8.000000e+00 : f32
    %4 = vector.broadcast %cst_6 : f32 to vector<32x32xf32>
    %5 = arith.divf %3, %4 : vector<32x32xf32>
    %cst_7 = arith.constant dense<0xFF800000> : vector<32x32xf32>
    %6 = vector.multi_reduction <maximumf>, %1, %cst_7 [1] : vector<32x8x32xf32> to vector<32x32xf32>
    %cst_8 = arith.constant dense<0x7F800000> : vector<32x32xf32>
    %7 = vector.multi_reduction <minimumf>, %1, %cst_8 [1] : vector<32x8x32xf32> to vector<32x32xf32>
    %8 = vector.shape_cast %5 : vector<32x32xf32> to vector<32x1x32xf32>
    %9 = vector.broadcast %8 : vector<32x1x32xf32> to vector<32x8x32xf32>
    %10 = arith.subf %1, %9 : vector<32x8x32xf32>
    %11 = arith.mulf %10, %10 : vector<32x8x32xf32>
    %cst_9 = arith.constant dense<0.000000e+00> : vector<32x32xf32>
    %12 = vector.multi_reduction <add>, %11, %cst_9 [1] : vector<32x8x32xf32> to vector<32x32xf32>
    %cst_10 = arith.constant 8.000000e+00 : f32
    %13 = vector.broadcast %cst_10 : f32 to vector<32x32xf32>
    %14 = arith.divf %12, %13 : vector<32x32xf32>
    %cst_11 = arith.constant 0.000000e+00 : f32
    %15 = vector.broadcast %cst_11 : f32 to vector<32x32xf32>
    %16 = arith.maximumf %14, %15 : vector<32x32xf32>
    %cst_12 = arith.constant 9.99999974E-6 : f32
    %17 = vector.broadcast %cst_12 : f32 to vector<32x32xf32>
    %18 = arith.addf %16, %17 : vector<32x32xf32>
    %19 = math.sqrt %18 : vector<32x32xf32>
    %20 = tpu.concatenate %5, %6, %7, %19 in 1 : vector<32x32xf32>, vector<32x32xf32>, vector<32x32xf32>, vector<32x32xf32> -> vector<32x128xf32>
    %cst_13 = arith.constant 1.000000e+00 : f32
    %21 = vector.broadcast %cst_13 : f32 to vector<32x1xf32>
    %22 = arith.addf %2, %21 : vector<32x1xf32>
    %23 = math.log %22 : vector<32x1xf32>
    %24 = vector.broadcast %0 : f32 to vector<32x1xf32>
    %25 = arith.divf %23, %24 : vector<32x1xf32>
    %26 = tpu.reciprocal %23 : vector<32x1xf32> -> vector<32x1xf32>
    %27 = vector.broadcast %0 : f32 to vector<32x1xf32>
    %28 = arith.mulf %27, %26 : vector<32x1xf32>
    %c0_14 = arith.constant 0 : index
    %c0_15 = arith.constant 0 : index
    %29 = vector.load %arg5[%c0_14, %c0_15] : memref<1x32xf32, #tpu.memory_space<vmem>>, vector<1x32xf32>
    %c0_16 = arith.constant 0 : index
    %c0_17 = arith.constant 0 : index
    %30 = vector.load %arg4[%c0_16, %c0_17] : memref<384x32xf32, #tpu.memory_space<vmem>>, vector<128x32xf32>
    %cst_18 = arith.constant dense<0.000000e+00> : vector<32x32xf32>
    %31 = tpu.matmul %20, %30, %cst_18 {dimension_numbers = #tpu.dot_dimension_numbers<[1], [0], [0], [1], [0, 0, 1, 1], [], []>} : vector<32x128xf32>, vector<128x32xf32>, vector<32x32xf32> -> vector<32x32xf32>
    %c128 = arith.constant 128 : index
    %c0_19 = arith.constant 0 : index
    %32 = vector.load %arg4[%c128, %c0_19] : memref<384x32xf32, #tpu.memory_space<vmem>>, vector<128x32xf32>
    %cst_20 = arith.constant dense<0.000000e+00> : vector<32x32xf32>
    %33 = tpu.matmul %20, %32, %cst_20 {dimension_numbers = #tpu.dot_dimension_numbers<[1], [0], [0], [1], [0, 0, 1, 1], [], []>} : vector<32x128xf32>, vector<128x32xf32>, vector<32x32xf32> -> vector<32x32xf32>
    %34 = vector.broadcast %25 : vector<32x1xf32> to vector<32x32xf32>
    %35 = arith.mulf %34, %33 : vector<32x32xf32>
    %36 = arith.addf %31, %35 : vector<32x32xf32>
    %c256 = arith.constant 256 : index
    %c0_21 = arith.constant 0 : index
    %37 = vector.load %arg4[%c256, %c0_21] : memref<384x32xf32, #tpu.memory_space<vmem>>, vector<128x32xf32>
    %cst_22 = arith.constant dense<0.000000e+00> : vector<32x32xf32>
    %38 = tpu.matmul %20, %37, %cst_22 {dimension_numbers = #tpu.dot_dimension_numbers<[1], [0], [0], [1], [0, 0, 1, 1], [], []>} : vector<32x128xf32>, vector<128x32xf32>, vector<32x32xf32> -> vector<32x32xf32>
    %39 = vector.broadcast %28 : vector<32x1xf32> to vector<32x32xf32>
    %40 = arith.mulf %39, %38 : vector<32x32xf32>
    %41 = arith.addf %36, %40 : vector<32x32xf32>
    %42 = vector.broadcast %29 : vector<1x32xf32> to vector<32x32xf32>
    %43 = arith.addf %41, %42 : vector<32x32xf32>
    %cst_23 = arith.constant 0.000000e+00 : f32
    %44 = vector.broadcast %cst_23 : f32 to vector<32x32xf32>
    %45 = arith.maximumf %43, %44 : vector<32x32xf32>
    %c0_24 = arith.constant 0 : index
    %c0_25 = arith.constant 0 : index
    %46 = vector.load %arg6[%c0_24, %c0_25] : memref<32x32xf32, #tpu.memory_space<vmem>>, vector<32x32xf32>
    %c0_26 = arith.constant 0 : index
    %c0_27 = arith.constant 0 : index
    %47 = vector.load %arg7[%c0_26, %c0_27] : memref<1x32xf32, #tpu.memory_space<vmem>>, vector<1x32xf32>
    %cst_28 = arith.constant dense<0.000000e+00> : vector<32x32xf32>
    %48 = tpu.matmul %45, %46, %cst_28 {dimension_numbers = #tpu.dot_dimension_numbers<[1], [0], [0], [1], [0, 0, 1, 1], [], []>} : vector<32x32xf32>, vector<32x32xf32>, vector<32x32xf32> -> vector<32x32xf32>
    %49 = vector.broadcast %47 : vector<1x32xf32> to vector<32x32xf32>
    %50 = arith.addf %48, %49 : vector<32x32xf32>
    %c0_29 = arith.constant 0 : index
    %c0_30 = arith.constant 0 : index
    %51 = vector.load %arg8[%c0_29, %c0_30] : memref<32x32xf32, #tpu.memory_space<vmem>>, vector<32x32xf32>
    tpu.vector_store %arg8[%c0_29, %c0_30], %50 {strides = array<i32>} : memref<32x32xf32, #tpu.memory_space<vmem>>, vector<32x32xf32>,
    return
  }
  func.func @transform_0(%arg0: i32) -> (i32, i32) {
    %c0_i32 = arith.constant 0 : i32
    %c0_i32_0 = arith.constant 0 : i32
    %c0_i32_1 = arith.constant 0 : i32
    return %c0_i32, %c0_i32_0 : i32, i32
  }
  func.func @transform_1(%arg0: i32) -> (i32, i32, i32) {
    %c0_i32 = arith.constant 0 : i32
    %c0_i32_0 = arith.constant 0 : i32
    %c0_i32_1 = arith.constant 0 : i32
    return %arg0, %c0_i32, %c0_i32_0 : i32, i32, i32
  }
  func.func @transform_2(%arg0: i32) -> (i32, i32) {
    %c0_i32 = arith.constant 0 : i32
    %c0_i32_0 = arith.constant 0 : i32
    return %arg0, %c0_i32 : i32, i32
  }
  func.func @transform_3(%arg0: i32) -> (i32, i32) {
    %c0_i32 = arith.constant 0 : i32
    %c0_i32_0 = arith.constant 0 : i32
    %c0_i32_1 = arith.constant 0 : i32
    return %c0_i32, %c0_i32_0 : i32, i32
  }
  func.func @transform_4(%arg0: i32) -> (i32, i32) {
    %c0_i32 = arith.constant 0 : i32
    %c0_i32_0 = arith.constant 0 : i32
    %c0_i32_1 = arith.constant 0 : i32
    return %c0_i32, %c0_i32_0 : i32, i32
  }
  func.func @transform_5(%arg0: i32) -> (i32, i32) {
    %c0_i32 = arith.constant 0 : i32
    %c0_i32_0 = arith.constant 0 : i32
    %c0_i32_1 = arith.constant 0 : i32
    return %c0_i32, %c0_i32_0 : i32, i32
  }
  func.func @transform_6(%arg0: i32) -> (i32, i32) {
    %c0_i32 = arith.constant 0 : i32
    %c0_i32_0 = arith.constant 0 : i32
    %c0_i32_1 = arith.constant 0 : i32
    return %c0_i32, %c0_i32_0 : i32, i32
  }
  func.func @transform_7(%arg0: i32) -> (i32, i32) {
    %c0_i32 = arith.constant 0 : i32
    %c0_i32_0 = arith.constant 0 : i32
    return %arg0, %c0_i32 : i32, i32
  }
}

</mosaic_0001>

<llo_original>
// kernel: tpu_custom_call.1
$region0: #{tpu_custom_call.1}
  #allocation0 [shape = 'u32[]', space=smem, size = 0x4, offset = 0x4, fixed_abs, tag = 'smem constant byte address 0x4 - core index']
  #allocation1 [shape = 'u32[72,128]{1,0:T(1,128)}', space=vmem, size = 0x9000, scoped, tag = 'internal scratch']
  #allocation2 [shape = 'f32[1,1]{1,0:T(1,128)S(6)}', space=smem, size = 0x200, scoped, tag = 'scoped memory for tpu_custom_call.1']
  %s0 = inlined_call_operand.<no memory space> [shape: f32[1,1], index: 0, kind: input, shape index: {}]
  %s1 = inlined_call_operand.vmem [shape: f32[64,8,32], index: 1, kind: input, shape index: {}]
  %s2 = inlined_call_operand.vmem [shape: f32[64,1], index: 2, kind: input, shape index: {}]
  %s3 = inlined_call_operand.vmem [shape: f32[384,32], index: 3, kind: input, shape index: {}]
  %s4 = inlined_call_operand.vmem [shape: f32[1,32], index: 4, kind: input, shape index: {}]
  %s5 = inlined_call_operand.vmem [shape: f32[32,32], index: 5, kind: input, shape index: {}]
  %s6 = inlined_call_operand.vmem [shape: f32[1,32], index: 6, kind: input, shape index: {}]
  %s7 = inlined_call_operand.vmem [shape: f32[64,32], index: 7, kind: output, shape index: {}]
  %s8 = sld [smem:[#allocation0]]
  $region61: #{tpu_custom_call.1} parent=0
    _
  %s10 = ssub.s32 1, %s8
  %s11 = scalar_select 0, %s10, %s8
  %12 = sst [smem:[#allocation2]] %s0
  loop: start=0, step=1, limit=4
  $region2: #{tpu_custom_call.1} parent=0 // loop_pre_header
    _
  $region3: #{tpu_custom_call.1} parent=0 // loop_header
    %s14 = sphi 0, %s18
    %p15 = scmp.ge.s32.totalorder %s14, 4
    %s22 = sphi 0, %s22
    %s24 = sphi 0, %s22
    %s25 = sphi 0, %s24
    %s39 = sphi 0, %s25
    %s45 = sphi 0, %s47
    %s48 = sphi 0, %s45
    %s49 = sphi 0, %s48
    %s65 = sphi 0, %s49
    %s71 = sphi 0, %s73
    %s74 = sphi 0, %s71
    %s75 = sphi 0, %s74
    %s91 = sphi 0, %s75
    %s95 = sphi 0, %s95
    %s97 = sphi 0, %s95
    %s98 = sphi 0, %s97
    %s112 = sphi 0, %s98
    %s116 = sphi 0, %s116
    %s118 = sphi 0, %s116
    %s119 = sphi 0, %s118
    %s133 = sphi 0, %s119
    %s137 = sphi 0, %s137
    %s139 = sphi 0, %s137
    %s140 = sphi 0, %s139
    %s154 = sphi 0, %s140
    %s158 = sphi 0, %s158
    %s160 = sphi 0, %s158
    %s161 = sphi 0, %s160
    %s175 = sphi 0, %s161
    %s181 = sphi 0, %s183
    %s184 = sphi 0, %s181
    %s185 = sphi 0, %s184
    %s201 = sphi 0, %s185
  $region4: #{tpu_custom_call.1} parent=0 // loop_header_branch
    %17 = sbr.rel (%p15) target = $region8
  $region5: #{tpu_custom_call.1} parent=0 // loop_body
    %s19 = ssub.s32 %s14, 1
    %s20 = ssub.s32 %s14, 2
    %s21 = sadd.s32 %s14, 1
    %s23 = sadd.s32 %s22, 1
    %p26 = scmp.eq.s32.totalorder %s14, 1
    %p27 = scmp.ne.s32.totalorder %s22, %s24
    %p28 = scmp.eq.s32.totalorder %s14, 0
    %p29 = por %p27, %p28
    %p30 = scmp.ne.s32.totalorder %s22, %s24
    %p31 = scmp.eq.s32.totalorder %s19, 1
    %p32 = por %p30, %p31
    %p33 = scmp.ne.s32.totalorder %s24, %s25
    %p34 = scmp.eq.s32.totalorder %s19, 0
    %p35 = por %p33, %p34
    %p36 = scmp.ne.s32.totalorder %s24, %s25
    %p37 = scmp.eq.s32.totalorder %s20, 1
    %p38 = por %p36, %p37
    %p40 = scmp.ne.s32.totalorder %s25, %s39
    %p41 = scmp.eq.s32.totalorder %s20, 0
    %p42 = por %p40, %p41
    %s43 = ssub.s32 %s14, %s21
    %p44 = scmp.eq.s32.totalorder %s43, 0
    %s46 = sadd.s32 %s45, 1
    %s47 = scalar_select %p44, %s45, %s46
    %p50 = pneg %p44
    %p51 = scmp.eq.s32.totalorder %s14, 1
    %p52 = por %p50, %p51
    %p53 = scmp.ne.s32.totalorder %s45, %s48
    %p54 = scmp.eq.s32.totalorder %s14, 0
    %p55 = por %p53, %p54
    %p56 = scmp.ne.s32.totalorder %s45, %s48
    %p57 = scmp.eq.s32.totalorder %s19, 1
    %p58 = por %p56, %p57
    %p59 = scmp.ne.s32.totalorder %s48, %s49
    %p60 = scmp.eq.s32.totalorder %s19, 0
    %p61 = por %p59, %p60
    %p62 = scmp.ne.s32.totalorder %s48, %s49
    %p63 = scmp.eq.s32.totalorder %s20, 1
    %p64 = por %p62, %p63
    %p66 = scmp.ne.s32.totalorder %s49, %s65
    %p67 = scmp.eq.s32.totalorder %s20, 0
    %p68 = por %p66, %p67
    %s69 = ssub.s32 %s14, %s21
    %p70 = scmp.eq.s32.totalorder %s69, 0
    %s72 = sadd.s32 %s71, 1
    %s73 = scalar_select %p70, %s71, %s72
    %p76 = pneg %p70
    %p77 = scmp.eq.s32.totalorder %s14, 1
    %p78 = por %p76, %p77
    %p79 = scmp.ne.s32.totalorder %s71, %s74
    %p80 = scmp.eq.s32.totalorder %s14, 0
    %p81 = por %p79, %p80
    %p82 = scmp.ne.s32.totalorder %s71, %s74
    %p83 = scmp.eq.s32.totalorder %s19, 1
    %p84 = por %p82, %p83
    %p85 = scmp.ne.s32.totalorder %s74, %s75
    %p86 = scmp.eq.s32.totalorder %s19, 0
    %p87 = por %p85, %p86
    %p88 = scmp.ne.s32.totalorder %s74, %s75
    %p89 = scmp.eq.s32.totalorder %s20, 1
    %p90 = por %p88, %p89
    %p92 = scmp.ne.s32.totalorder %s75, %s91
    %p93 = scmp.eq.s32.totalorder %s20, 0
    %p94 = por %p92, %p93
    %s96 = sadd.s32 %s95, 1
    %p99 = scmp.eq.s32.totalorder %s14, 1
    %p100 = scmp.ne.s32.totalorder %s95, %s97
    %p101 = scmp.eq.s32.totalorder %s14, 0
    %p102 = por %p100, %p101
    %p103 = scmp.ne.s32.totalorder %s95, %s97
    %p104 = scmp.eq.s32.totalorder %s19, 1
    %p105 = por %p103, %p104
    %p106 = scmp.ne.s32.totalorder %s97, %s98
    %p107 = scmp.eq.s32.totalorder %s19, 0
    %p108 = por %p106, %p107
    %p109 = scmp.ne.s32.totalorder %s97, %s98
    %p110 = scmp.eq.s32.totalorder %s20, 1
    %p111 = por %p109, %p110
    %p113 = scmp.ne.s32.totalorder %s98, %s112
    %p114 = scmp.eq.s32.totalorder %s20, 0
    %p115 = por %p113, %p114
    %s117 = sadd.s32 %s116, 1
    %p120 = scmp.eq.s32.totalorder %s14, 1
    %p121 = scmp.ne.s32.totalorder %s116, %s118
    %p122 = scmp.eq.s32.totalorder %s14, 0
    %p123 = por %p121, %p122
    %p124 = scmp.ne.s32.totalorder %s116, %s118
    %p125 = scmp.eq.s32.totalorder %s19, 1
    %p126 = por %p124, %p125
    %p127 = scmp.ne.s32.totalorder %s118, %s119
    %p128 = scmp.eq.s32.totalorder %s19, 0
    %p129 = por %p127, %p128
    %p130 = scmp.ne.s32.totalorder %s118, %s119
    %p131 = scmp.eq.s32.totalorder %s20, 1
    %p132 = por %p130, %p131
    %p134 = scmp.ne.s32.totalorder %s119, %s133
    %p135 = scmp.eq.s32.totalorder %s20, 0
    %p136 = por %p134, %p135
    %s138 = sadd.s32 %s137, 1
    %p141 = scmp.eq.s32.totalorder %s14, 1
    %p142 = scmp.ne.s32.totalorder %s137, %s139
    %p143 = scmp.eq.s32.totalorder %s14, 0
    %p144 = por %p142, %p143
    %p145 = scmp.ne.s32.totalorder %s137, %s139
    %p146 = scmp.eq.s32.totalorder %s19, 1
    %p147 = por %p145, %p146
    %p148 = scmp.ne.s32.totalorder %s139, %s140
    %p149 = scmp.eq.s32.totalorder %s19, 0
    %p150 = por %p148, %p149
    %p151 = scmp.ne.s32.totalorder %s139, %s140
    %p152 = scmp.eq.s32.totalorder %s20, 1
    %p153 = por %p151, %p152
    %p155 = scmp.ne.s32.totalorder %s140, %s154
    %p156 = scmp.eq.s32.totalorder %s20, 0
    %p157 = por %p155, %p156
    %s159 = sadd.s32 %s158, 1
    %p162 = scmp.eq.s32.totalorder %s14, 1
    %p163 = scmp.ne.s32.totalorder %s158, %s160
    %p164 = scmp.eq.s32.totalorder %s14, 0
    %p165 = por %p163, %p164
    %p166 = scmp.ne.s32.totalorder %s158, %s160
    %p167 = scmp.eq.s32.totalorder %s19, 1
    %p168 = por %p166, %p167
    %p169 = scmp.ne.s32.totalorder %s160, %s161
    %p170 = scmp.eq.s32.totalorder %s19, 0
    %p171 = por %p169, %p170
    %p172 = scmp.ne.s32.totalorder %s160, %s161
    %p173 = scmp.eq.s32.totalorder %s20, 1
    %p174 = por %p172, %p173
    %p176 = scmp.ne.s32.totalorder %s161, %s175
    %p177 = scmp.eq.s32.totalorder %s20, 0
    %p178 = por %p176, %p177
    %s179 = ssub.s32 %s14, %s21
    %p180 = scmp.eq.s32.totalorder %s179, 0
    %s182 = sadd.s32 %s181, 1
    %s183 = scalar_select %p180, %s181, %s182
    %p186 = pneg %p180
    %p187 = scmp.eq.s32.totalorder %s14, 1
    %p188 = por %p186, %p187
    %p189 = scmp.ne.s32.totalorder %s181, %s184
    %p190 = scmp.eq.s32.totalorder %s14, 0
    %p191 = por %p189, %p190
    %p192 = scmp.ne.s32.totalorder %s181, %s184
    %p193 = scmp.eq.s32.totalorder %s19, 1
    %p194 = por %p192, %p193
    %p195 = scmp.ne.s32.totalorder %s184, %s185
    %p196 = scmp.eq.s32.totalorder %s19, 0
    %p197 = por %p195, %p196
    %p198 = scmp.ne.s32.totalorder %s184, %s185
    %p199 = scmp.eq.s32.totalorder %s20, 1
    %p200 = por %p198, %p199
    %p202 = scmp.ne.s32.totalorder %s185, %s201
    %p203 = scmp.eq.s32.totalorder %s20, 0
    %p204 = por %p202, %p203
    %p205 = scmp.le.s32.totalorder 1, %s14
    %p206 = scmp.lt.s32.totalorder %s14, 3
    %p207 = pnand %p205, %p206
    %p208 = pneg %p207
    // Predicated region
    $region9: #{tpu_custom_call.1} parent=5 // pred_check
      _
    $region10: #{tpu_custom_call.1} parent=5 // pred_check_branch
      %210 = sbr.rel (%p207) target = $region12
    $region11: #{tpu_custom_call.1} parent=5 // pred_region
      %s211 = ssub.s32 %s14, 1
      // Predicated region
      $region13: #{tpu_custom_call.1} parent=11 // pred_check
        %p212 = pneg %p35
      $region14: #{tpu_custom_call.1} parent=11 // pred_check_branch
        %214 = sbr.rel (%p212) target = $region16
      $region15: #{tpu_custom_call.1} parent=11 // pred_region
        _
      $region16: #{tpu_custom_call.1} parent=11 // pred_fallthru
        _
      // Predicated region
      $region17: #{tpu_custom_call.1} parent=11 // pred_check
        %p215 = pneg %p108
      $region18: #{tpu_custom_call.1} parent=11 // pred_check_branch
        %217 = sbr.rel (%p215) target = $region20
      $region19: #{tpu_custom_call.1} parent=11 // pred_region
        _
      $region20: #{tpu_custom_call.1} parent=11 // pred_fallthru
        _
      // Predicated region
      $region21: #{tpu_custom_call.1} parent=11 // pred_check
        %p218 = pneg %p129
      $region22: #{tpu_custom_call.1} parent=11 // pred_check_branch
        %220 = sbr.rel (%p218) target = $region24
      $region23: #{tpu_custom_call.1} parent=11 // pred_region
        _
      $region24: #{tpu_custom_call.1} parent=11 // pred_fallthru
        _
      // Predicated region
      $region25: #{tpu_custom_call.1} parent=11 // pred_check
        %p221 = pneg %p150
      $region26: #{tpu_custom_call.1} parent=11 // pred_check_branch
        %223 = sbr.rel (%p221) target = $region28
      $region27: #{tpu_custom_call.1} parent=11 // pred_region
        _
      $region28: #{tpu_custom_call.1} parent=11 // pred_fallthru
        _
      // Predicated region
      $region29: #{tpu_custom_call.1} parent=11 // pred_check
        %p224 = pneg %p171
      $region30: #{tpu_custom_call.1} parent=11 // pred_check_branch
        %226 = sbr.rel (%p224) target = $region32
      $region31: #{tpu_custom_call.1} parent=11 // pred_region
        _
      $region32: #{tpu_custom_call.1} parent=11 // pred_fallthru
        _
    $region12: #{tpu_custom_call.1} parent=5 // pred_fallthru
      _
    %p227 = scmp.lt.s32.totalorder %s14, 2
    // Predicated region
    $region33: #{tpu_custom_call.1} parent=5 // pred_check
      %p228 = pneg %p227
    $region34: #{tpu_custom_call.1} parent=5 // pred_check_branch
      %230 = sbr.rel (%p228) target = $region36
    $region35: #{tpu_custom_call.1} parent=5 // pred_region
      // Predicated region
      $region37: #{tpu_custom_call.1} parent=35 // pred_check
        %p231 = pneg %p55
      $region38: #{tpu_custom_call.1} parent=35 // pred_check_branch
        %233 = sbr.rel (%p231) target = $region40
      $region39: #{tpu_custom_call.1} parent=35 // pred_region
        %s234 = smul.u32 32, %s14
        %p235 = scmp.lt.s32.totalorder %s234, 63
        %s236 = scalar_select %p235, %s234, 63
        %s237 = smul.addr %s236, 8
        %s238 = scalar_lea.vmem %s1, %s237
        %s239 = smul.u32 32, %s14
      $region40: #{tpu_custom_call.1} parent=35 // pred_fallthru
        _
      // Predicated region
      $region41: #{tpu_custom_call.1} parent=35 // pred_check
        %p240 = pneg %p81
      $region42: #{tpu_custom_call.1} parent=35 // pred_check_branch
        %242 = sbr.rel (%p240) target = $region44
      $region43: #{tpu_custom_call.1} parent=35 // pred_region
        %s243 = smul.u32 4, %s14
        %p244 = scmp.lt.s32.totalorder %s243, 7
        %s245 = scalar_select %p244, %s243, 7
        %s246 = smul.addr %s245, 8
        %s247 = scalar_lea.vmem %s2, %s246
        %s248 = smul.u32 4, %s14
      $region44: #{tpu_custom_call.1} parent=35 // pred_fallthru
        _
    $region36: #{tpu_custom_call.1} parent=5 // pred_fallthru
      _
    %p249 = scmp.le.s32.totalorder 1, %s14
    %p250 = scmp.lt.s32.totalorder %s14, 3
    %p251 = pnand %p249, %p250
    %p252 = pneg %p251
    // Predicated region
    $region45: #{tpu_custom_call.1} parent=5 // pred_check
      _
    $region46: #{tpu_custom_call.1} parent=5 // pred_check_branch
      %254 = sbr.rel (%p251) target = $region48
    $region47: #{tpu_custom_call.1} parent=5 // pred_region
      %s255 = ssub.s32 %s14, 1
      %p256 = pneg %p35
      %p257 = pneg %p32
      %s258 = smul.u32 32, %s19
      %p259 = scmp.lt.s32.totalorder %s258, 63
      %s260 = scalar_select %p259, %s258, 63
      %s261 = smul.addr %s260, 8
      %s262 = scalar_lea.vmem %s1, %s261
      %p263 = pneg %p61
      %p264 = pneg %p58
      %s265 = smul.u32 4, %s19
      %p266 = scmp.lt.s32.totalorder %s265, 7
      %s267 = scalar_select %p266, %s265, 7
      %s268 = smul.addr %s267, 8
      %s269 = scalar_lea.vmem %s2, %s268
      %p270 = pneg %p87
      %p271 = pneg %p84
      %p272 = pneg %p108
      %p273 = pneg %p105
      %p274 = pneg %p129
      %p275 = pneg %p126
      %p276 = pneg %p150
      %p277 = pneg %p147
      %p278 = pneg %p171
      %p279 = pneg %p168
      %p280 = pneg %p197
      %p281 = pneg %p194
      %s282 = smul.u32 4, %s19
      %p283 = scmp.lt.s32.totalorder %s282, 7
      %s284 = scalar_select %p283, %s282, 7
      %s285 = smul.addr %s284, 8
      %s286 = scalar_lea.vmem %s7, %s285
      %s287 = smul.u32 32, %s19
      %p288 = scmp.lt.s32.totalorder %s287, 63
      %s289 = scalar_select %p288, %s287, 63
      %s290 = smul.addr %s289, 8
      %s291 = scalar_lea.vmem %s1, %s290
      %s292 = smul.u32 32, %s19
      %s293 = smul.u32 4, %s19
      %p294 = scmp.lt.s32.totalorder %s293, 7
      %s295 = scalar_select %p294, %s293, 7
      %s296 = smul.addr %s295, 8
      %s297 = scalar_lea.vmem %s2, %s296
      %s298 = smul.u32 4, %s19
      %s299 = smul.u32 4, %s19
      %p300 = scmp.lt.s32.totalorder %s299, 7
      %s301 = scalar_select %p300, %s299, 7
      %s302 = smul.addr %s301, 8
      %s303 = scalar_lea.vmem %s7, %s302
      %s304 = smul.u32 4, %s19
      %s305 = sld [smem:[#allocation2]]
      %v306 = vld [vmem:[%s291] sm:$0xff]
      %v307 = vld [vmem:[%s291 + $0x8] sm:$0xff]
      %v308 = vld [vmem:[%s291 + $0x10] sm:$0xff]
      %v309 = vld [vmem:[%s291 + $0x18] sm:$0xff]
      %v310 = vld [vmem:[%s291 + $0x20] sm:$0xff]
      %v311 = vld [vmem:[%s291 + $0x28] sm:$0xff]
      %v312 = vld [vmem:[%s291 + $0x30] sm:$0xff]
      %v313 = vld [vmem:[%s291 + $0x38] sm:$0xff]
      %v314 = vld [vmem:[%s291 + $0x40] sm:$0xff]
      %v315 = vld [vmem:[%s291 + $0x48] sm:$0xff]
      %v316 = vld [vmem:[%s291 + $0x50] sm:$0xff]
      %v317 = vld [vmem:[%s291 + $0x58] sm:$0xff]
      %v318 = vld [vmem:[%s291 + $0x60] sm:$0xff]
      %v319 = vld [vmem:[%s291 + $0x68] sm:$0xff]
      %v320 = vld [vmem:[%s291 + $0x70] sm:$0xff]
      %v321 = vld [vmem:[%s291 + $0x78] sm:$0xff]
      %v322 = vld [vmem:[%s291 + $0x80] sm:$0xff]
      %v323 = vld [vmem:[%s291 + $0x88] sm:$0xff]
      %v324 = vld [vmem:[%s291 + $0x90] sm:$0xff]
      %v325 = vld [vmem:[%s291 + $0x98] sm:$0xff]
      %v326 = vld [vmem:[%s291 + $0xa0] sm:$0xff]
      %v327 = vld [vmem:[%s291 + $0xa8] sm:$0xff]
      %v328 = vld [vmem:[%s291 + $0xb0] sm:$0xff]
      %v329 = vld [vmem:[%s291 + $0xb8] sm:$0xff]
      %v330 = vld [vmem:[%s291 + $0xc0] sm:$0xff]
      %v331 = vld [vmem:[%s291 + $0xc8] sm:$0xff]
      %v332 = vld [vmem:[%s291 + $0xd0] sm:$0xff]
      %v333 = vld [vmem:[%s291 + $0xd8] sm:$0xff]
      %v334 = vld [vmem:[%s291 + $0xe0] sm:$0xff]
      %v335 = vld [vmem:[%s291 + $0xe8] sm:$0xff]
      %v336 = vld [vmem:[%s291 + $0xf0] sm:$0xff]
      %v337 = vld [vmem:[%s291 + $0xf8] sm:$0xff]
      %v338 = vld [vmem:[%s297] sm:$0xff]
      %v339 = vld [vmem:[%s297 + $0x8] sm:$0xff]
      %v340 = vld [vmem:[%s297 + $0x10] sm:$0xff]
      %v341 = vld [vmem:[%s297 + $0x18] sm:$0xff]
      %vm342 = vcmask 261120
      %v343 = vsel %vm342, %v306, 0.0
      %v344 = vrot.slane %v343, 4
      %v345 = vadd.f32 %v343, %v344
      %v346 = vrot.slane %v345, 2
      %v347 = vadd.f32 %v345, %v346
      %v348 = vrot.slane %v347, 1
      %v349 = vadd.f32 %v347, %v348
      %v350 = vsel %vm342, %v307, 0.0
      %v351 = vrot.slane %v350, 4
      %v352 = vadd.f32 %v350, %v351
      %v353 = vrot.slane %v352, 2
      %v354 = vadd.f32 %v352, %v353
      %v355 = vrot.slane %v354, 1
      %v356 = vadd.f32 %v354, %v355
      %v357 = vsel %vm342, %v308, 0.0
      %v358 = vrot.slane %v357, 4
      %v359 = vadd.f32 %v357, %v358
      %v360 = vrot.slane %v359, 2
      %v361 = vadd.f32 %v359, %v360
      %v362 = vrot.slane %v361, 1
      %v363 = vadd.f32 %v361, %v362
      %v364 = vsel %vm342, %v309, 0.0
      %v365 = vrot.slane %v364, 4
      %v366 = vadd.f32 %v364, %v365
      %v367 = vrot.slane %v366, 2
      %v368 = vadd.f32 %v366, %v367
      %v369 = vrot.slane %v368, 1
      %v370 = vadd.f32 %v368, %v369
      %v371 = vsel %vm342, %v310, 0.0
      %v372 = vrot.slane %v371, 4
      %v373 = vadd.f32 %v371, %v372
      %v374 = vrot.slane %v373, 2
      %v375 = vadd.f32 %v373, %v374
      %v376 = vrot.slane %v375, 1
      %v377 = vadd.f32 %v375, %v376
      %v378 = vsel %vm342, %v311, 0.0
      %v379 = vrot.slane %v378, 4
      %v380 = vadd.f32 %v378, %v379
      %v381 = vrot.slane %v380, 2
      %v382 = vadd.f32 %v380, %v381
      %v383 = vrot.slane %v382, 1
      %v384 = vadd.f32 %v382, %v383
      %v385 = vsel %vm342, %v312, 0.0
      %v386 = vrot.slane %v385, 4
      %v387 = vadd.f32 %v385, %v386
      %v388 = vrot.slane %v387, 2
      %v389 = vadd.f32 %v387, %v388
      %v390 = vrot.slane %v389, 1
      %v391 = vadd.f32 %v389, %v390
      %v392 = vsel %vm342, %v313, 0.0
      %v393 = vrot.slane %v392, 4
      %v394 = vadd.f32 %v392, %v393
      %v395 = vrot.slane %v394, 2
      %v396 = vadd.f32 %v394, %v395
      %v397 = vrot.slane %v396, 1
      %v398 = vadd.f32 %v396, %v397
      %v399 = vsel %vm342, %v314, 0.0
      %v400 = vrot.slane %v399, 4
      %v401 = vadd.f32 %v399, %v400
      %v402 = vrot.slane %v401, 2
      %v403 = vadd.f32 %v401, %v402
      %v404 = vrot.slane %v403, 1
      %v405 = vadd.f32 %v403, %v404
      %v406 = vsel %vm342, %v315, 0.0
      %v407 = vrot.slane %v406, 4
      %v408 = vadd.f32 %v406, %v407
      %v409 = vrot.slane %v408, 2
      %v410 = vadd.f32 %v408, %v409
      %v411 = vrot.slane %v410, 1
      %v412 = vadd.f32 %v410, %v411
      %v413 = vsel %vm342, %v316, 0.0
      %v414 = vrot.slane %v413, 4
      %v415 = vadd.f32 %v413, %v414
      %v416 = vrot.slane %v415, 2
      %v417 = vadd.f32 %v415, %v416
      %v418 = vrot.slane %v417, 1
      %v419 = vadd.f32 %v417, %v418
      %v420 = vsel %vm342, %v317, 0.0
      %v421 = vrot.slane %v420, 4
      %v422 = vadd.f32 %v420, %v421
      %v423 = vrot.slane %v422, 2
      %v424 = vadd.f32 %v422, %v423
      %v425 = vrot.slane %v424, 1
      %v426 = vadd.f32 %v424, %v425
      %v427 = vsel %vm342, %v318, 0.0
      %v428 = vrot.slane %v427, 4
      %v429 = vadd.f32 %v427, %v428
      %v430 = vrot.slane %v429, 2
      %v431 = vadd.f32 %v429, %v430
      %v432 = vrot.slane %v431, 1
      %v433 = vadd.f32 %v431, %v432
      %v434 = vsel %vm342, %v319, 0.0
      %v435 = vrot.slane %v434, 4
      %v436 = vadd.f32 %v434, %v435
      %v437 = vrot.slane %v436, 2
      %v438 = vadd.f32 %v436, %v437
      %v439 = vrot.slane %v438, 1
      %v440 = vadd.f32 %v438, %v439
      %v441 = vsel %vm342, %v320, 0.0
      %v442 = vrot.slane %v441, 4
      %v443 = vadd.f32 %v441, %v442
      %v444 = vrot.slane %v443, 2
      %v445 = vadd.f32 %v443, %v444
      %v446 = vrot.slane %v445, 1
      %v447 = vadd.f32 %v445, %v446
      %v448 = vsel %vm342, %v321, 0.0
      %v449 = vrot.slane %v448, 4
      %v450 = vadd.f32 %v448, %v449
      %v451 = vrot.slane %v450, 2
      %v452 = vadd.f32 %v450, %v451
      %v453 = vrot.slane %v452, 1
      %v454 = vadd.f32 %v452, %v453
      %v455 = vsel %vm342, %v322, 0.0
      %v456 = vrot.slane %v455, 4
      %v457 = vadd.f32 %v455, %v456
      %v458 = vrot.slane %v457, 2
      %v459 = vadd.f32 %v457, %v458
      %v460 = vrot.slane %v459, 1
      %v461 = vadd.f32 %v459, %v460
      %v462 = vsel %vm342, %v323, 0.0
      %v463 = vrot.slane %v462, 4
      %v464 = vadd.f32 %v462, %v463
      %v465 = vrot.slane %v464, 2
      %v466 = vadd.f32 %v464, %v465
      %v467 = vrot.slane %v466, 1
      %v468 = vadd.f32 %v466, %v467
      %v469 = vsel %vm342, %v324, 0.0
      %v470 = vrot.slane %v469, 4
      %v471 = vadd.f32 %v469, %v470
      %v472 = vrot.slane %v471, 2
      %v473 = vadd.f32 %v471, %v472
      %v474 = vrot.slane %v473, 1
      %v475 = vadd.f32 %v473, %v474
      %v476 = vsel %vm342, %v325, 0.0
      %v477 = vrot.slane %v476, 4
      %v478 = vadd.f32 %v476, %v477
      %v479 = vrot.slane %v478, 2
      %v480 = vadd.f32 %v478, %v479
      %v481 = vrot.slane %v480, 1
      %v482 = vadd.f32 %v480, %v481
      %v483 = vsel %vm342, %v326, 0.0
      %v484 = vrot.slane %v483, 4
      %v485 = vadd.f32 %v483, %v484
      %v486 = vrot.slane %v485, 2
      %v487 = vadd.f32 %v485, %v486
      %v488 = vrot.slane %v487, 1
      %v489 = vadd.f32 %v487, %v488
      %v490 = vsel %vm342, %v327, 0.0
      %v491 = vrot.slane %v490, 4
      %v492 = vadd.f32 %v490, %v491
      %v493 = vrot.slane %v492, 2
      %v494 = vadd.f32 %v492, %v493
      %v495 = vrot.slane %v494, 1
      %v496 = vadd.f32 %v494, %v495
      %v497 = vsel %vm342, %v328, 0.0
      %v498 = vrot.slane %v497, 4
      %v499 = vadd.f32 %v497, %v498
      %v500 = vrot.slane %v499, 2
      %v501 = vadd.f32 %v499, %v500
      %v502 = vrot.slane %v501, 1
      %v503 = vadd.f32 %v501, %v502
      %v504 = vsel %vm342, %v329, 0.0
      %v505 = vrot.slane %v504, 4
      %v506 = vadd.f32 %v504, %v505
      %v507 = vrot.slane %v506, 2
      %v508 = vadd.f32 %v506, %v507
      %v509 = vrot.slane %v508, 1
      %v510 = vadd.f32 %v508, %v509
      %v511 = vsel %vm342, %v330, 0.0
      %v512 = vrot.slane %v511, 4
      %v513 = vadd.f32 %v511, %v512
      %v514 = vrot.slane %v513, 2
      %v515 = vadd.f32 %v513, %v514
      %v516 = vrot.slane %v515, 1
      %v517 = vadd.f32 %v515, %v516
      %v518 = vsel %vm342, %v331, 0.0
      %v519 = vrot.slane %v518, 4
      %v520 = vadd.f32 %v518, %v519
      %v521 = vrot.slane %v520, 2
      %v522 = vadd.f32 %v520, %v521
      %v523 = vrot.slane %v522, 1
      %v524 = vadd.f32 %v522, %v523
      %v525 = vsel %vm342, %v332, 0.0
      %v526 = vrot.slane %v525, 4
      %v527 = vadd.f32 %v525, %v526
      %v528 = vrot.slane %v527, 2
      %v529 = vadd.f32 %v527, %v528
      %v530 = vrot.slane %v529, 1
      %v531 = vadd.f32 %v529, %v530
      %v532 = vsel %vm342, %v333, 0.0
      %v533 = vrot.slane %v532, 4
      %v534 = vadd.f32 %v532, %v533
      %v535 = vrot.slane %v534, 2
      %v536 = vadd.f32 %v534, %v535
      %v537 = vrot.slane %v536, 1
      %v538 = vadd.f32 %v536, %v537
      %v539 = vsel %vm342, %v334, 0.0
      %v540 = vrot.slane %v539, 4
      %v541 = vadd.f32 %v539, %v540
      %v542 = vrot.slane %v541, 2
      %v543 = vadd.f32 %v541, %v542
      %v544 = vrot.slane %v543, 1
      %v545 = vadd.f32 %v543, %v544
      %v546 = vsel %vm342, %v335, 0.0
      %v547 = vrot.slane %v546, 4
      %v548 = vadd.f32 %v546, %v547
      %v549 = vrot.slane %v548, 2
      %v550 = vadd.f32 %v548, %v549
      %v551 = vrot.slane %v550, 1
      %v552 = vadd.f32 %v550, %v551
      %v553 = vsel %vm342, %v336, 0.0
      %v554 = vrot.slane %v553, 4
      %v555 = vadd.f32 %v553, %v554
      %v556 = vrot.slane %v555, 2
      %v557 = vadd.f32 %v555, %v556
      %v558 = vrot.slane %v557, 1
      %v559 = vadd.f32 %v557, %v558
      %v560 = vsel %vm342, %v337, 0.0
      %v561 = vrot.slane %v560, 4
      %v562 = vadd.f32 %v560, %v561
      %v563 = vrot.slane %v562, 2
      %v564 = vadd.f32 %v562, %v563
      %v565 = vrot.slane %v564, 1
      %v566 = vadd.f32 %v564, %v565
      %v567 = vrcp.pop 8.0
      %v568 = vmul.f32 8.0, %v567
      %v569 = vsub.f32 1.0, %v568
      %v570 = vmul.f32 %v567, %v569
      %v571 = vadd.f32 %v567, %v570
      %vm572 = vweird.f32 %v567
      %v573 = vsel %vm572, %v567, %v571
      %v574 = vmul.f32 %v349, %v573
      %v575 = vmul.f32 %v356, %v573
      %v576 = vmul.f32 %v363, %v573
      %v577 = vmul.f32 %v370, %v573
      %v578 = vmul.f32 %v377, %v573
      %v579 = vmul.f32 %v384, %v573
      %v580 = vmul.f32 %v391, %v573
      %v581 = vmul.f32 %v398, %v573
      %v582 = vmul.f32 %v405, %v573
      %v583 = vmul.f32 %v412, %v573
      %v584 = vmul.f32 %v419, %v573
      %v585 = vmul.f32 %v426, %v573
      %v586 = vmul.f32 %v433, %v573
      %v587 = vmul.f32 %v440, %v573
      %v588 = vmul.f32 %v447, %v573
      %v589 = vmul.f32 %v454, %v573
      %v590 = vmul.f32 %v461, %v573
      %v591 = vmul.f32 %v468, %v573
      %v592 = vmul.f32 %v475, %v573
      %v593 = vmul.f32 %v482, %v573
      %v594 = vmul.f32 %v489, %v573
      %v595 = vmul.f32 %v496, %v573
      %v596 = vmul.f32 %v503, %v573
      %v597 = vmul.f32 %v510, %v573
      %v598 = vmul.f32 %v517, %v573
      %v599 = vmul.f32 %v524, %v573
      %v600 = vmul.f32 %v531, %v573
      %v601 = vmul.f32 %v538, %v573
      %v602 = vmul.f32 %v545, %v573
      %v603 = vmul.f32 %v552, %v573
      %v604 = vmul.f32 %v559, %v573
      %v605 = vmul.f32 %v566, %v573
      %v606 = vsel %vm342, %v306, -inf
      %v607 = vrot.slane %v606, 4
      %v608 = vmax.f32 %v606, %v607
      %v609 = vrot.slane %v608, 2
      %v610 = vmax.f32 %v608, %v609
      %v611 = vrot.slane %v610, 1
      %v612 = vmax.f32 %v610, %v611
      %v613 = vsel %vm342, %v307, -inf
      %v614 = vrot.slane %v613, 4
      %v615 = vmax.f32 %v613, %v614
      %v616 = vrot.slane %v615, 2
      %v617 = vmax.f32 %v615, %v616
      %v618 = vrot.slane %v617, 1
      %v619 = vmax.f32 %v617, %v618
      %v620 = vsel %vm342, %v308, -inf
      %v621 = vrot.slane %v620, 4
      %v622 = vmax.f32 %v620, %v621
      %v623 = vrot.slane %v622, 2
      %v624 = vmax.f32 %v622, %v623
      %v625 = vrot.slane %v624, 1
      %v626 = vmax.f32 %v624, %v625
      %v627 = vsel %vm342, %v309, -inf
      %v628 = vrot.slane %v627, 4
      %v629 = vmax.f32 %v627, %v628
      %v630 = vrot.slane %v629, 2
      %v631 = vmax.f32 %v629, %v630
      %v632 = vrot.slane %v631, 1
      %v633 = vmax.f32 %v631, %v632
      %v634 = vsel %vm342, %v310, -inf
      %v635 = vrot.slane %v634, 4
      %v636 = vmax.f32 %v634, %v635
      %v637 = vrot.slane %v636, 2
      %v638 = vmax.f32 %v636, %v637
      %v639 = vrot.slane %v638, 1
      %v640 = vmax.f32 %v638, %v639
      %v641 = vsel %vm342, %v311, -inf
      %v642 = vrot.slane %v641, 4
      %v643 = vmax.f32 %v641, %v642
      %v644 = vrot.slane %v643, 2
      %v645 = vmax.f32 %v643, %v644
      %v646 = vrot.slane %v645, 1
      %v647 = vmax.f32 %v645, %v646
      %v648 = vsel %vm342, %v312, -inf
      %v649 = vrot.slane %v648, 4
      %v650 = vmax.f32 %v648, %v649
      %v651 = vrot.slane %v650, 2
      %v652 = vmax.f32 %v650, %v651
      %v653 = vrot.slane %v652, 1
      %v654 = vmax.f32 %v652, %v653
      %v655 = vsel %vm342, %v313, -inf
      %v656 = vrot.slane %v655, 4
      %v657 = vmax.f32 %v655, %v656
      %v658 = vrot.slane %v657, 2
      %v659 = vmax.f32 %v657, %v658
      %v660 = vrot.slane %v659, 1
      %v661 = vmax.f32 %v659, %v660
      %v662 = vsel %vm342, %v314, -inf
      %v663 = vrot.slane %v662, 4
      %v664 = vmax.f32 %v662, %v663
      %v665 = vrot.slane %v664, 2
      %v666 = vmax.f32 %v664, %v665
      %v667 = vrot.slane %v666, 1
      %v668 = vmax.f32 %v666, %v667
      %v669 = vsel %vm342, %v315, -inf
      %v670 = vrot.slane %v669, 4
      %v671 = vmax.f32 %v669, %v670
      %v672 = vrot.slane %v671, 2
      %v673 = vmax.f32 %v671, %v672
      %v674 = vrot.slane %v673, 1
      %v675 = vmax.f32 %v673, %v674
      %v676 = vsel %vm342, %v316, -inf
      %v677 = vrot.slane %v676, 4
      %v678 = vmax.f32 %v676, %v677
      %v679 = vrot.slane %v678, 2
      %v680 = vmax.f32 %v678, %v679
      %v681 = vrot.slane %v680, 1
      %v682 = vmax.f32 %v680, %v681
      %v683 = vsel %vm342, %v317, -inf
      %v684 = vrot.slane %v683, 4
      %v685 = vmax.f32 %v683, %v684
      %v686 = vrot.slane %v685, 2
      %v687 = vmax.f32 %v685, %v686
      %v688 = vrot.slane %v687, 1
      %v689 = vmax.f32 %v687, %v688
      %v690 = vsel %vm342, %v318, -inf
      %v691 = vrot.slane %v690, 4
      %v692 = vmax.f32 %v690, %v691
      %v693 = vrot.slane %v692, 2
      %v694 = vmax.f32 %v692, %v693
      %v695 = vrot.slane %v694, 1
      %v696 = vmax.f32 %v694, %v695
      %v697 = vsel %vm342, %v319, -inf
      %v698 = vrot.slane %v697, 4
      %v699 = vmax.f32 %v697, %v698
      %v700 = vrot.slane %v699, 2
      %v701 = vmax.f32 %v699, %v700
      %v702 = vrot.slane %v701, 1
      %v703 = vmax.f32 %v701, %v702
      %v704 = vsel %vm342, %v320, -inf
      %v705 = vrot.slane %v704, 4
      %v706 = vmax.f32 %v704, %v705
      %v707 = vrot.slane %v706, 2
      %v708 = vmax.f32 %v706, %v707
      %v709 = vrot.slane %v708, 1
      %v710 = vmax.f32 %v708, %v709
      %v711 = vsel %vm342, %v321, -inf
      %v712 = vrot.slane %v711, 4
      %v713 = vmax.f32 %v711, %v712
      %v714 = vrot.slane %v713, 2
      %v715 = vmax.f32 %v713, %v714
      %v716 = vrot.slane %v715, 1
      %v717 = vmax.f32 %v715, %v716
      %v718 = vsel %vm342, %v322, -inf
      %v719 = vrot.slane %v718, 4
      %v720 = vmax.f32 %v718, %v719
      %v721 = vrot.slane %v720, 2
      %v722 = vmax.f32 %v720, %v721
      %v723 = vrot.slane %v722, 1
      %v724 = vmax.f32 %v722, %v723
      %v725 = vsel %vm342, %v323, -inf
      %v726 = vrot.slane %v725, 4
      %v727 = vmax.f32 %v725, %v726
      %v728 = vrot.slane %v727, 2
      %v729 = vmax.f32 %v727, %v728
      %v730 = vrot.slane %v729, 1
      %v731 = vmax.f32 %v729, %v730
      %v732 = vsel %vm342, %v324, -inf
      %v733 = vrot.slane %v732, 4
      %v734 = vmax.f32 %v732, %v733
      %v735 = vrot.slane %v734, 2
      %v736 = vmax.f32 %v734, %v735
      %v737 = vrot.slane %v736, 1
      %v738 = vmax.f32 %v736, %v737
      %v739 = vsel %vm342, %v325, -inf
      %v740 = vrot.slane %v739, 4
      %v741 = vmax.f32 %v739, %v740
      %v742 = vrot.slane %v741, 2
      %v743 = vmax.f32 %v741, %v742
      %v744 = vrot.slane %v743, 1
      %v745 = vmax.f32 %v743, %v744
      %v746 = vsel %vm342, %v326, -inf
      %v747 = vrot.slane %v746, 4
      %v748 = vmax.f32 %v746, %v747
      %v749 = vrot.slane %v748, 2
      %v750 = vmax.f32 %v748, %v749
      %v751 = vrot.slane %v750, 1
      %v752 = vmax.f32 %v750, %v751
      %v753 = vsel %vm342, %v327, -inf
      %v754 = vrot.slane %v753, 4
      %v755 = vmax.f32 %v753, %v754
      %v756 = vrot.slane %v755, 2
      %v757 = vmax.f32 %v755, %v756
      %v758 = vrot.slane %v757, 1
      %v759 = vmax.f32 %v757, %v758
      %v760 = vsel %vm342, %v328, -inf
      %v761 = vrot.slane %v760, 4
      %v762 = vmax.f32 %v760, %v761
      %v763 = vrot.slane %v762, 2
      %v764 = vmax.f32 %v762, %v763
      %v765 = vrot.slane %v764, 1
      %v766 = vmax.f32 %v764, %v765
      %v767 = vsel %vm342, %v329, -inf
      %v768 = vrot.slane %v767, 4
      %v769 = vmax.f32 %v767, %v768
      %v770 = vrot.slane %v769, 2
      %v771 = vmax.f32 %v769, %v770
      %v772 = vrot.slane %v771, 1
      %v773 = vmax.f32 %v771, %v772
      %v774 = vsel %vm342, %v330, -inf
      %v775 = vrot.slane %v774, 4
      %v776 = vmax.f32 %v774, %v775
      %v777 = vrot.slane %v776, 2
      %v778 = vmax.f32 %v776, %v777
      %v779 = vrot.slane %v778, 1
      %v780 = vmax.f32 %v778, %v779
      %v781 = vsel %vm342, %v331, -inf
      %v782 = vrot.slane %v781, 4
      %v783 = vmax.f32 %v781, %v782
      %v784 = vrot.slane %v783, 2
      %v785 = vmax.f32 %v783, %v784
      %v786 = vrot.slane %v785, 1
      %v787 = vmax.f32 %v785, %v786
      %v788 = vsel %vm342, %v332, -inf
      %v789 = vrot.slane %v788, 4
      %v790 = vmax.f32 %v788, %v789
      %v791 = vrot.slane %v790, 2
      %v792 = vmax.f32 %v790, %v791
      %v793 = vrot.slane %v792, 1
      %v794 = vmax.f32 %v792, %v793
      %v795 = vsel %vm342, %v333, -inf
      %v796 = vrot.slane %v795, 4
      %v797 = vmax.f32 %v795, %v796
      %v798 = vrot.slane %v797, 2
      %v799 = vmax.f32 %v797, %v798
      %v800 = vrot.slane %v799, 1
      %v801 = vmax.f32 %v799, %v800
      %v802 = vsel %vm342, %v334, -inf
      %v803 = vrot.slane %v802, 4
      %v804 = vmax.f32 %v802, %v803
      %v805 = vrot.slane %v804, 2
      %v806 = vmax.f32 %v804, %v805
      %v807 = vrot.slane %v806, 1
      %v808 = vmax.f32 %v806, %v807
      %v809 = vsel %vm342, %v335, -inf
      %v810 = vrot.slane %v809, 4
      %v811 = vmax.f32 %v809, %v810
      %v812 = vrot.slane %v811, 2
      %v813 = vmax.f32 %v811, %v812
      %v814 = vrot.slane %v813, 1
      %v815 = vmax.f32 %v813, %v814
      %v816 = vsel %vm342, %v336, -inf
      %v817 = vrot.slane %v816, 4
      %v818 = vmax.f32 %v816, %v817
      %v819 = vrot.slane %v818, 2
      %v820 = vmax.f32 %v818, %v819
      %v821 = vrot.slane %v820, 1
      %v822 = vmax.f32 %v820, %v821
      %v823 = vsel %vm342, %v337, -inf
      %v824 = vrot.slane %v823, 4
      %v825 = vmax.f32 %v823, %v824
      %v826 = vrot.slane %v825, 2
      %v827 = vmax.f32 %v825, %v826
      %v828 = vrot.slane %v827, 1
      %v829 = vmax.f32 %v827, %v828
      %v830 = vsel %vm342, %v306, inf
      %v831 = vrot.slane %v830, 4
      %v832 = vmin.f32 %v830, %v831
      %v833 = vrot.slane %v832, 2
      %v834 = vmin.f32 %v832, %v833
      %v835 = vrot.slane %v834, 1
      %v836 = vmin.f32 %v834, %v835
      %v837 = vsel %vm342, %v307, inf
      %v838 = vrot.slane %v837, 4
      %v839 = vmin.f32 %v837, %v838
      %v840 = vrot.slane %v839, 2
      %v841 = vmin.f32 %v839, %v840
      %v842 = vrot.slane %v841, 1
      %v843 = vmin.f32 %v841, %v842
      %v844 = vsel %vm342, %v308, inf
      %v845 = vrot.slane %v844, 4
      %v846 = vmin.f32 %v844, %v845
      %v847 = vrot.slane %v846, 2
      %v848 = vmin.f32 %v846, %v847
      %v849 = vrot.slane %v848, 1
      %v850 = vmin.f32 %v848, %v849
      %v851 = vsel %vm342, %v309, inf
      %v852 = vrot.slane %v851, 4
      %v853 = vmin.f32 %v851, %v852
      %v854 = vrot.slane %v853, 2
      %v855 = vmin.f32 %v853, %v854
      %v856 = vrot.slane %v855, 1
      %v857 = vmin.f32 %v855, %v856
      %v858 = vsel %vm342, %v310, inf
      %v859 = vrot.slane %v858, 4
      %v860 = vmin.f32 %v858, %v859
      %v861 = vrot.slane %v860, 2
      %v862 = vmin.f32 %v860, %v861
      %v863 = vrot.slane %v862, 1
      %v864 = vmin.f32 %v862, %v863
      %v865 = vsel %vm342, %v311, inf
      %v866 = vrot.slane %v865, 4
      %v867 = vmin.f32 %v865, %v866
      %v868 = vrot.slane %v867, 2
      %v869 = vmin.f32 %v867, %v868
      %v870 = vrot.slane %v869, 1
      %v871 = vmin.f32 %v869, %v870
      %v872 = vsel %vm342, %v312, inf
      %v873 = vrot.slane %v872, 4
      %v874 = vmin.f32 %v872, %v873
      %v875 = vrot.slane %v874, 2
      %v876 = vmin.f32 %v874, %v875
      %v877 = vrot.slane %v876, 1
      %v878 = vmin.f32 %v876, %v877
      %v879 = vsel %vm342, %v313, inf
      %v880 = vrot.slane %v879, 4
      %v881 = vmin.f32 %v879, %v880
      %v882 = vrot.slane %v881, 2
      %v883 = vmin.f32 %v881, %v882
      %v884 = vrot.slane %v883, 1
      %v885 = vmin.f32 %v883, %v884
      %v886 = vsel %vm342, %v314, inf
      %v887 = vrot.slane %v886, 4
      %v888 = vmin.f32 %v886, %v887
      %v889 = vrot.slane %v888, 2
      %v890 = vmin.f32 %v888, %v889
      %v891 = vrot.slane %v890, 1
      %v892 = vmin.f32 %v890, %v891
      %v893 = vsel %vm342, %v315, inf
      %v894 = vrot.slane %v893, 4
      %v895 = vmin.f32 %v893, %v894
      %v896 = vrot.slane %v895, 2
      %v897 = vmin.f32 %v895, %v896
      %v898 = vrot.slane %v897, 1
      %v899 = vmin.f32 %v897, %v898
      %v900 = vsel %vm342, %v316, inf
      %v901 = vrot.slane %v900, 4
      %v902 = vmin.f32 %v900, %v901
      %v903 = vrot.slane %v902, 2
      %v904 = vmin.f32 %v902, %v903
      %v905 = vrot.slane %v904, 1
      %v906 = vmin.f32 %v904, %v905
      %v907 = vsel %vm342, %v317, inf
      %v908 = vrot.slane %v907, 4
      %v909 = vmin.f32 %v907, %v908
      %v910 = vrot.slane %v909, 2
      %v911 = vmin.f32 %v909, %v910
      %v912 = vrot.slane %v911, 1
      %v913 = vmin.f32 %v911, %v912
      %v914 = vsel %vm342, %v318, inf
      %v915 = vrot.slane %v914, 4
      %v916 = vmin.f32 %v914, %v915
      %v917 = vrot.slane %v916, 2
      %v918 = vmin.f32 %v916, %v917
      %v919 = vrot.slane %v918, 1
      %v920 = vmin.f32 %v918, %v919
      %v921 = vsel %vm342, %v319, inf
      %v922 = vrot.slane %v921, 4
      %v923 = vmin.f32 %v921, %v922
      %v924 = vrot.slane %v923, 2
      %v925 = vmin.f32 %v923, %v924
      %v926 = vrot.slane %v925, 1
      %v927 = vmin.f32 %v925, %v926
      %v928 = vsel %vm342, %v320, inf
      %v929 = vrot.slane %v928, 4
      %v930 = vmin.f32 %v928, %v929
      %v931 = vrot.slane %v930, 2
      %v932 = vmin.f32 %v930, %v931
      %v933 = vrot.slane %v932, 1
      %v934 = vmin.f32 %v932, %v933
      %v935 = vsel %vm342, %v321, inf
      %v936 = vrot.slane %v935, 4
      %v937 = vmin.f32 %v935, %v936
      %v938 = vrot.slane %v937, 2
      %v939 = vmin.f32 %v937, %v938
      %v940 = vrot.slane %v939, 1
      %v941 = vmin.f32 %v939, %v940
      %v942 = vsel %vm342, %v322, inf
      %v943 = vrot.slane %v942, 4
      %v944 = vmin.f32 %v942, %v943
      %v945 = vrot.slane %v944, 2
      %v946 = vmin.f32 %v944, %v945
      %v947 = vrot.slane %v946, 1
      %v948 = vmin.f32 %v946, %v947
      %v949 = vsel %vm342, %v323, inf
      %v950 = vrot.slane %v949, 4
      %v951 = vmin.f32 %v949, %v950
      %v952 = vrot.slane %v951, 2
      %v953 = vmin.f32 %v951, %v952
      %v954 = vrot.slane %v953, 1
      %v955 = vmin.f32 %v953, %v954
      %v956 = vsel %vm342, %v324, inf
      %v957 = vrot.slane %v956, 4
      %v958 = vmin.f32 %v956, %v957
      %v959 = vrot.slane %v958, 2
      %v960 = vmin.f32 %v958, %v959
      %v961 = vrot.slane %v960, 1
      %v962 = vmin.f32 %v960, %v961
      %v963 = vsel %vm342, %v325, inf
      %v964 = vrot.slane %v963, 4
      %v965 = vmin.f32 %v963, %v964
      %v966 = vrot.slane %v965, 2
      %v967 = vmin.f32 %v965, %v966
      %v968 = vrot.slane %v967, 1
      %v969 = vmin.f32 %v967, %v968
      %v970 = vsel %vm342, %v326, inf
      %v971 = vrot.slane %v970, 4
      %v972 = vmin.f32 %v970, %v971
      %v973 = vrot.slane %v972, 2
      %v974 = vmin.f32 %v972, %v973
      %v975 = vrot.slane %v974, 1
      %v976 = vmin.f32 %v974, %v975
      %v977 = vsel %vm342, %v327, inf
      %v978 = vrot.slane %v977, 4
      %v979 = vmin.f32 %v977, %v978
      %v980 = vrot.slane %v979, 2
      %v981 = vmin.f32 %v979, %v980
      %v982 = vrot.slane %v981, 1
      %v983 = vmin.f32 %v981, %v982
      %v984 = vsel %vm342, %v328, inf
      %v985 = vrot.slane %v984, 4
      %v986 = vmin.f32 %v984, %v985
      %v987 = vrot.slane %v986, 2
      %v988 = vmin.f32 %v986, %v987
      %v989 = vrot.slane %v988, 1
      %v990 = vmin.f32 %v988, %v989
      %v991 = vsel %vm342, %v329, inf
      %v992 = vrot.slane %v991, 4
      %v993 = vmin.f32 %v991, %v992
      %v994 = vrot.slane %v993, 2
      %v995 = vmin.f32 %v993, %v994
      %v996 = vrot.slane %v995, 1
      %v997 = vmin.f32 %v995, %v996
      %v998 = vsel %vm342, %v330, inf
      %v999 = vrot.slane %v998, 4
      %v1000 = vmin.f32 %v998, %v999
      %v1001 = vrot.slane %v1000, 2
      %v1002 = vmin.f32 %v1000, %v1001
      %v1003 = vrot.slane %v1002, 1
      %v1004 = vmin.f32 %v1002, %v1003
      %v1005 = vsel %vm342, %v331, inf
      %v1006 = vrot.slane %v1005, 4
      %v1007 = vmin.f32 %v1005, %v1006
      %v1008 = vrot.slane %v1007, 2
      %v1009 = vmin.f32 %v1007, %v1008
      %v1010 = vrot.slane %v1009, 1
      %v1011 = vmin.f32 %v1009, %v1010
      %v1012 = vsel %vm342, %v332, inf
      %v1013 = vrot.slane %v1012, 4
      %v1014 = vmin.f32 %v1012, %v1013
      %v1015 = vrot.slane %v1014, 2
      %v1016 = vmin.f32 %v1014, %v1015
      %v1017 = vrot.slane %v1016, 1
      %v1018 = vmin.f32 %v1016, %v1017
      %v1019 = vsel %vm342, %v333, inf
      %v1020 = vrot.slane %v1019, 4
      %v1021 = vmin.f32 %v1019, %v1020
      %v1022 = vrot.slane %v1021, 2
      %v1023 = vmin.f32 %v1021, %v1022
      %v1024 = vrot.slane %v1023, 1
      %v1025 = vmin.f32 %v1023, %v1024
      %v1026 = vsel %vm342, %v334, inf
      %v1027 = vrot.slane %v1026, 4
      %v1028 = vmin.f32 %v1026, %v1027
      %v1029 = vrot.slane %v1028, 2
      %v1030 = vmin.f32 %v1028, %v1029
      %v1031 = vrot.slane %v1030, 1
      %v1032 = vmin.f32 %v1030, %v1031
      %v1033 = vsel %vm342, %v335, inf
      %v1034 = vrot.slane %v1033, 4
      %v1035 = vmin.f32 %v1033, %v1034
      %v1036 = vrot.slane %v1035, 2
      %v1037 = vmin.f32 %v1035, %v1036
      %v1038 = vrot.slane %v1037, 1
      %v1039 = vmin.f32 %v1037, %v1038
      %v1040 = vsel %vm342, %v336, inf
      %v1041 = vrot.slane %v1040, 4
      %v1042 = vmin.f32 %v1040, %v1041
      %v1043 = vrot.slane %v1042, 2
      %v1044 = vmin.f32 %v1042, %v1043
      %v1045 = vrot.slane %v1044, 1
      %v1046 = vmin.f32 %v1044, %v1045
      %v1047 = vsel %vm342, %v337, inf
      %v1048 = vrot.slane %v1047, 4
      %v1049 = vmin.f32 %v1047, %v1048
      %v1050 = vrot.slane %v1049, 2
      %v1051 = vmin.f32 %v1049, %v1050
      %v1052 = vrot.slane %v1051, 1
      %v1053 = vmin.f32 %v1051, %v1052
      %v1054 = vsub.f32 %v306, %v574
      %v1055 = vsub.f32 %v307, %v575
      %v1056 = vsub.f32 %v308, %v576
      %v1057 = vsub.f32 %v309, %v577
      %v1058 = vsub.f32 %v310, %v578
      %v1059 = vsub.f32 %v311, %v579
      %v1060 = vsub.f32 %v312, %v580
      %v1061 = vsub.f32 %v313, %v581
      %v1062 = vsub.f32 %v314, %v582
      %v1063 = vsub.f32 %v315, %v583
      %v1064 = vsub.f32 %v316, %v584
      %v1065 = vsub.f32 %v317, %v585
      %v1066 = vsub.f32 %v318, %v586
      %v1067 = vsub.f32 %v319, %v587
      %v1068 = vsub.f32 %v320, %v588
      %v1069 = vsub.f32 %v321, %v589
      %v1070 = vsub.f32 %v322, %v590
      %v1071 = vsub.f32 %v323, %v591
      %v1072 = vsub.f32 %v324, %v592
      %v1073 = vsub.f32 %v325, %v593
      %v1074 = vsub.f32 %v326, %v594
      %v1075 = vsub.f32 %v327, %v595
      %v1076 = vsub.f32 %v328, %v596
      %v1077 = vsub.f32 %v329, %v597
      %v1078 = vsub.f32 %v330, %v598
      %v1079 = vsub.f32 %v331, %v599
      %v1080 = vsub.f32 %v332, %v600
      %v1081 = vsub.f32 %v333, %v601
      %v1082 = vsub.f32 %v334, %v602
      %v1083 = vsub.f32 %v335, %v603
      %v1084 = vsub.f32 %v336, %v604
      %v1085 = vsub.f32 %v337, %v605
      %v1086 = vmul.f32 %v1054, %v1054
      %v1087 = vmul.f32 %v1055, %v1055
      %v1088 = vmul.f32 %v1056, %v1056
      %v1089 = vmul.f32 %v1057, %v1057
      %v1090 = vmul.f32 %v1058, %v1058
      %v1091 = vmul.f32 %v1059, %v1059
      %v1092 = vmul.f32 %v1060, %v1060
      %v1093 = vmul.f32 %v1061, %v1061
      %v1094 = vmul.f32 %v1062, %v1062
      %v1095 = vmul.f32 %v1063, %v1063
      %v1096 = vmul.f32 %v1064, %v1064
      %v1097 = vmul.f32 %v1065, %v1065
      %v1098 = vmul.f32 %v1066, %v1066
      %v1099 = vmul.f32 %v1067, %v1067
      %v1100 = vmul.f32 %v1068, %v1068
      %v1101 = vmul.f32 %v1069, %v1069
      %v1102 = vmul.f32 %v1070, %v1070
      %v1103 = vmul.f32 %v1071, %v1071
      %v1104 = vmul.f32 %v1072, %v1072
      %v1105 = vmul.f32 %v1073, %v1073
      %v1106 = vmul.f32 %v1074, %v1074
      %v1107 = vmul.f32 %v1075, %v1075
      %v1108 = vmul.f32 %v1076, %v1076
      %v1109 = vmul.f32 %v1077, %v1077
      %v1110 = vmul.f32 %v1078, %v1078
      %v1111 = vmul.f32 %v1079, %v1079
      %v1112 = vmul.f32 %v1080, %v1080
      %v1113 = vmul.f32 %v1081, %v1081
      %v1114 = vmul.f32 %v1082, %v1082
      %v1115 = vmul.f32 %v1083, %v1083
      %v1116 = vmul.f32 %v1084, %v1084
      %v1117 = vmul.f32 %v1085, %v1085
      %v1118 = vsel %vm342, %v1086, 0.0
      %v1119 = vrot.slane %v1118, 4
      %v1120 = vadd.f32 %v1118, %v1119
      %v1121 = vrot.slane %v1120, 2
      %v1122 = vadd.f32 %v1120, %v1121
      %v1123 = vrot.slane %v1122, 1
      %v1124 = vadd.f32 %v1122, %v1123
      %v1125 = vsel %vm342, %v1087, 0.0
      %v1126 = vrot.slane %v1125, 4
      %v1127 = vadd.f32 %v1125, %v1126
      %v1128 = vrot.slane %v1127, 2
      %v1129 = vadd.f32 %v1127, %v1128
      %v1130 = vrot.slane %v1129, 1
      %v1131 = vadd.f32 %v1129, %v1130
      %v1132 = vsel %vm342, %v1088, 0.0
      %v1133 = vrot.slane %v1132, 4
      %v1134 = vadd.f32 %v1132, %v1133
      %v1135 = vrot.slane %v1134, 2
      %v1136 = vadd.f32 %v1134, %v1135
      %v1137 = vrot.slane %v1136, 1
      %v1138 = vadd.f32 %v1136, %v1137
      %v1139 = vsel %vm342, %v1089, 0.0
      %v1140 = vrot.slane %v1139, 4
      %v1141 = vadd.f32 %v1139, %v1140
      %v1142 = vrot.slane %v1141, 2
      %v1143 = vadd.f32 %v1141, %v1142
      %v1144 = vrot.slane %v1143, 1
      %v1145 = vadd.f32 %v1143, %v1144
      %v1146 = vsel %vm342, %v1090, 0.0
      %v1147 = vrot.slane %v1146, 4
      %v1148 = vadd.f32 %v1146, %v1147
      %v1149 = vrot.slane %v1148, 2
      %v1150 = vadd.f32 %v1148, %v1149
      %v1151 = vrot.slane %v1150, 1
      %v1152 = vadd.f32 %v1150, %v1151
      %v1153 = vsel %vm342, %v1091, 0.0
      %v1154 = vrot.slane %v1153, 4
      %v1155 = vadd.f32 %v1153, %v1154
      %v1156 = vrot.slane %v1155, 2
      %v1157 = vadd.f32 %v1155, %v1156
      %v1158 = vrot.slane %v1157, 1
      %v1159 = vadd.f32 %v1157, %v1158
      %v1160 = vsel %vm342, %v1092, 0.0
      %v1161 = vrot.slane %v1160, 4
      %v1162 = vadd.f32 %v1160, %v1161
      %v1163 = vrot.slane %v1162, 2
      %v1164 = vadd.f32 %v1162, %v1163
      %v1165 = vrot.slane %v1164, 1
      %v1166 = vadd.f32 %v1164, %v1165
      %v1167 = vsel %vm342, %v1093, 0.0
      %v1168 = vrot.slane %v1167, 4
      %v1169 = vadd.f32 %v1167, %v1168
      %v1170 = vrot.slane %v1169, 2
      %v1171 = vadd.f32 %v1169, %v1170
      %v1172 = vrot.slane %v1171, 1
      %v1173 = vadd.f32 %v1171, %v1172
      %v1174 = vsel %vm342, %v1094, 0.0
      %v1175 = vrot.slane %v1174, 4
      %v1176 = vadd.f32 %v1174, %v1175
      %v1177 = vrot.slane %v1176, 2
      %v1178 = vadd.f32 %v1176, %v1177
      %v1179 = vrot.slane %v1178, 1
      %v1180 = vadd.f32 %v1178, %v1179
      %v1181 = vsel %vm342, %v1095, 0.0
      %v1182 = vrot.slane %v1181, 4
      %v1183 = vadd.f32 %v1181, %v1182
      %v1184 = vrot.slane %v1183, 2
      %v1185 = vadd.f32 %v1183, %v1184
      %v1186 = vrot.slane %v1185, 1
      %v1187 = vadd.f32 %v1185, %v1186
      %v1188 = vsel %vm342, %v1096, 0.0
      %v1189 = vrot.slane %v1188, 4
      %v1190 = vadd.f32 %v1188, %v1189
      %v1191 = vrot.slane %v1190, 2
      %v1192 = vadd.f32 %v1190, %v1191
      %v1193 = vrot.slane %v1192, 1
      %v1194 = vadd.f32 %v1192, %v1193
      %v1195 = vsel %vm342, %v1097, 0.0
      %v1196 = vrot.slane %v1195, 4
      %v1197 = vadd.f32 %v1195, %v1196
      %v1198 = vrot.slane %v1197, 2
      %v1199 = vadd.f32 %v1197, %v1198
      %v1200 = vrot.slane %v1199, 1
      %v1201 = vadd.f32 %v1199, %v1200
      %v1202 = vsel %vm342, %v1098, 0.0
      %v1203 = vrot.slane %v1202, 4
      %v1204 = vadd.f32 %v1202, %v1203
      %v1205 = vrot.slane %v1204, 2
      %v1206 = vadd.f32 %v1204, %v1205
      %v1207 = vrot.slane %v1206, 1
      %v1208 = vadd.f32 %v1206, %v1207
      %v1209 = vsel %vm342, %v1099, 0.0
      %v1210 = vrot.slane %v1209, 4
      %v1211 = vadd.f32 %v1209, %v1210
      %v1212 = vrot.slane %v1211, 2
      %v1213 = vadd.f32 %v1211, %v1212
      %v1214 = vrot.slane %v1213, 1
      %v1215 = vadd.f32 %v1213, %v1214
      %v1216 = vsel %vm342, %v1100, 0.0
      %v1217 = vrot.slane %v1216, 4
      %v1218 = vadd.f32 %v1216, %v1217
      %v1219 = vrot.slane %v1218, 2
      %v1220 = vadd.f32 %v1218, %v1219
      %v1221 = vrot.slane %v1220, 1
      %v1222 = vadd.f32 %v1220, %v1221
      %v1223 = vsel %vm342, %v1101, 0.0
      %v1224 = vrot.slane %v1223, 4
      %v1225 = vadd.f32 %v1223, %v1224
      %v1226 = vrot.slane %v1225, 2
      %v1227 = vadd.f32 %v1225, %v1226
      %v1228 = vrot.slane %v1227, 1
      %v1229 = vadd.f32 %v1227, %v1228
      %v1230 = vsel %vm342, %v1102, 0.0
      %v1231 = vrot.slane %v1230, 4
      %v1232 = vadd.f32 %v1230, %v1231
      %v1233 = vrot.slane %v1232, 2
      %v1234 = vadd.f32 %v1232, %v1233
      %v1235 = vrot.slane %v1234, 1
      %v1236 = vadd.f32 %v1234, %v1235
      %v1237 = vsel %vm342, %v1103, 0.0
      %v1238 = vrot.slane %v1237, 4
      %v1239 = vadd.f32 %v1237, %v1238
      %v1240 = vrot.slane %v1239, 2
      %v1241 = vadd.f32 %v1239, %v1240
      %v1242 = vrot.slane %v1241, 1
      %v1243 = vadd.f32 %v1241, %v1242
      %v1244 = vsel %vm342, %v1104, 0.0
      %v1245 = vrot.slane %v1244, 4
      %v1246 = vadd.f32 %v1244, %v1245
      %v1247 = vrot.slane %v1246, 2
      %v1248 = vadd.f32 %v1246, %v1247
      %v1249 = vrot.slane %v1248, 1
      %v1250 = vadd.f32 %v1248, %v1249
      %v1251 = vsel %vm342, %v1105, 0.0
      %v1252 = vrot.slane %v1251, 4
      %v1253 = vadd.f32 %v1251, %v1252
      %v1254 = vrot.slane %v1253, 2
      %v1255 = vadd.f32 %v1253, %v1254
      %v1256 = vrot.slane %v1255, 1
      %v1257 = vadd.f32 %v1255, %v1256
      %v1258 = vsel %vm342, %v1106, 0.0
      %v1259 = vrot.slane %v1258, 4
      %v1260 = vadd.f32 %v1258, %v1259
      %v1261 = vrot.slane %v1260, 2
      %v1262 = vadd.f32 %v1260, %v1261
      %v1263 = vrot.slane %v1262, 1
      %v1264 = vadd.f32 %v1262, %v1263
      %v1265 = vsel %vm342, %v1107, 0.0
      %v1266 = vrot.slane %v1265, 4
      %v1267 = vadd.f32 %v1265, %v1266
      %v1268 = vrot.slane %v1267, 2
      %v1269 = vadd.f32 %v1267, %v1268
      %v1270 = vrot.slane %v1269, 1
      %v1271 = vadd.f32 %v1269, %v1270
      %v1272 = vsel %vm342, %v1108, 0.0
      %v1273 = vrot.slane %v1272, 4
      %v1274 = vadd.f32 %v1272, %v1273
      %v1275 = vrot.slane %v1274, 2
      %v1276 = vadd.f32 %v1274, %v1275
      %v1277 = vrot.slane %v1276, 1
      %v1278 = vadd.f32 %v1276, %v1277
      %v1279 = vsel %vm342, %v1109, 0.0
      %v1280 = vrot.slane %v1279, 4
      %v1281 = vadd.f32 %v1279, %v1280
      %v1282 = vrot.slane %v1281, 2
      %v1283 = vadd.f32 %v1281, %v1282
      %v1284 = vrot.slane %v1283, 1
      %v1285 = vadd.f32 %v1283, %v1284
      %v1286 = vsel %vm342, %v1110, 0.0
      %v1287 = vrot.slane %v1286, 4
      %v1288 = vadd.f32 %v1286, %v1287
      %v1289 = vrot.slane %v1288, 2
      %v1290 = vadd.f32 %v1288, %v1289
      %v1291 = vrot.slane %v1290, 1
      %v1292 = vadd.f32 %v1290, %v1291
      %v1293 = vsel %vm342, %v1111, 0.0
      %v1294 = vrot.slane %v1293, 4
      %v1295 = vadd.f32 %v1293, %v1294
      %v1296 = vrot.slane %v1295, 2
      %v1297 = vadd.f32 %v1295, %v1296
      %v1298 = vrot.slane %v1297, 1
      %v1299 = vadd.f32 %v1297, %v1298
      %v1300 = vsel %vm342, %v1112, 0.0
      %v1301 = vrot.slane %v1300, 4
      %v1302 = vadd.f32 %v1300, %v1301
      %v1303 = vrot.slane %v1302, 2
      %v1304 = vadd.f32 %v1302, %v1303
      %v1305 = vrot.slane %v1304, 1
      %v1306 = vadd.f32 %v1304, %v1305
      %v1307 = vsel %vm342, %v1113, 0.0
      %v1308 = vrot.slane %v1307, 4
      %v1309 = vadd.f32 %v1307, %v1308
      %v1310 = vrot.slane %v1309, 2
      %v1311 = vadd.f32 %v1309, %v1310
      %v1312 = vrot.slane %v1311, 1
      %v1313 = vadd.f32 %v1311, %v1312
      %v1314 = vsel %vm342, %v1114, 0.0
      %v1315 = vrot.slane %v1314, 4
      %v1316 = vadd.f32 %v1314, %v1315
      %v1317 = vrot.slane %v1316, 2
      %v1318 = vadd.f32 %v1316, %v1317
      %v1319 = vrot.slane %v1318, 1
      %v1320 = vadd.f32 %v1318, %v1319
      %v1321 = vsel %vm342, %v1115, 0.0
      %v1322 = vrot.slane %v1321, 4
      %v1323 = vadd.f32 %v1321, %v1322
      %v1324 = vrot.slane %v1323, 2
      %v1325 = vadd.f32 %v1323, %v1324
      %v1326 = vrot.slane %v1325, 1
      %v1327 = vadd.f32 %v1325, %v1326
      %v1328 = vsel %vm342, %v1116, 0.0
      %v1329 = vrot.slane %v1328, 4
      %v1330 = vadd.f32 %v1328, %v1329
      %v1331 = vrot.slane %v1330, 2
      %v1332 = vadd.f32 %v1330, %v1331
      %v1333 = vrot.slane %v1332, 1
      %v1334 = vadd.f32 %v1332, %v1333
      %v1335 = vsel %vm342, %v1117, 0.0
      %v1336 = vrot.slane %v1335, 4
      %v1337 = vadd.f32 %v1335, %v1336
      %v1338 = vrot.slane %v1337, 2
      %v1339 = vadd.f32 %v1337, %v1338
      %v1340 = vrot.slane %v1339, 1
      %v1341 = vadd.f32 %v1339, %v1340
      %v1342 = vmul.f32 %v1124, %v573
      %v1343 = vmul.f32 %v1131, %v573
      %v1344 = vmul.f32 %v1138, %v573
      %v1345 = vmul.f32 %v1145, %v573
      %v1346 = vmul.f32 %v1152, %v573
      %v1347 = vmul.f32 %v1159, %v573
      %v1348 = vmul.f32 %v1166, %v573
      %v1349 = vmul.f32 %v1173, %v573
      %v1350 = vmul.f32 %v1180, %v573
      %v1351 = vmul.f32 %v1187, %v573
      %v1352 = vmul.f32 %v1194, %v573
      %v1353 = vmul.f32 %v1201, %v573
      %v1354 = vmul.f32 %v1208, %v573
      %v1355 = vmul.f32 %v1215, %v573
      %v1356 = vmul.f32 %v1222, %v573
      %v1357 = vmul.f32 %v1229, %v573
      %v1358 = vmul.f32 %v1236, %v573
      %v1359 = vmul.f32 %v1243, %v573
      %v1360 = vmul.f32 %v1250, %v573
      %v1361 = vmul.f32 %v1257, %v573
      %v1362 = vmul.f32 %v1264, %v573
      %v1363 = vmul.f32 %v1271, %v573
      %v1364 = vmul.f32 %v1278, %v573
      %v1365 = vmul.f32 %v1285, %v573
      %v1366 = vmul.f32 %v1292, %v573
      %v1367 = vmul.f32 %v1299, %v573
      %v1368 = vmul.f32 %v1306, %v573
      %v1369 = vmul.f32 %v1313, %v573
      %v1370 = vmul.f32 %v1320, %v573
      %v1371 = vmul.f32 %v1327, %v573
      %v1372 = vmul.f32 %v1334, %v573
      %v1373 = vmul.f32 %v1341, %v573
      %v1374 = vmax.f32 %v1342, 0.0
      %v1375 = vmax.f32 %v1343, 0.0
      %v1376 = vmax.f32 %v1344, 0.0
      %v1377 = vmax.f32 %v1345, 0.0
      %v1378 = vmax.f32 %v1346, 0.0
      %v1379 = vmax.f32 %v1347, 0.0
      %v1380 = vmax.f32 %v1348, 0.0
      %v1381 = vmax.f32 %v1349, 0.0
      %v1382 = vmax.f32 %v1350, 0.0
      %v1383 = vmax.f32 %v1351, 0.0
      %v1384 = vmax.f32 %v1352, 0.0
      %v1385 = vmax.f32 %v1353, 0.0
      %v1386 = vmax.f32 %v1354, 0.0
      %v1387 = vmax.f32 %v1355, 0.0
      %v1388 = vmax.f32 %v1356, 0.0
      %v1389 = vmax.f32 %v1357, 0.0
      %v1390 = vmax.f32 %v1358, 0.0
      %v1391 = vmax.f32 %v1359, 0.0
      %v1392 = vmax.f32 %v1360, 0.0
      %v1393 = vmax.f32 %v1361, 0.0
      %v1394 = vmax.f32 %v1362, 0.0
      %v1395 = vmax.f32 %v1363, 0.0
      %v1396 = vmax.f32 %v1364, 0.0
      %v1397 = vmax.f32 %v1365, 0.0
      %v1398 = vmax.f32 %v1366, 0.0
      %v1399 = vmax.f32 %v1367, 0.0
      %v1400 = vmax.f32 %v1368, 0.0
      %v1401 = vmax.f32 %v1369, 0.0
      %v1402 = vmax.f32 %v1370, 0.0
      %v1403 = vmax.f32 %v1371, 0.0
      %v1404 = vmax.f32 %v1372, 0.0
      %v1405 = vmax.f32 %v1373, 0.0
      %v1406 = vadd.f32 %v1374, 1e-05
      %v1407 = vadd.f32 %v1375, 1e-05
      %v1408 = vadd.f32 %v1376, 1e-05
      %v1409 = vadd.f32 %v1377, 1e-05
      %v1410 = vadd.f32 %v1378, 1e-05
      %v1411 = vadd.f32 %v1379, 1e-05
      %v1412 = vadd.f32 %v1380, 1e-05
      %v1413 = vadd.f32 %v1381, 1e-05
      %v1414 = vadd.f32 %v1382, 1e-05
      %v1415 = vadd.f32 %v1383, 1e-05
      %v1416 = vadd.f32 %v1384, 1e-05
      %v1417 = vadd.f32 %v1385, 1e-05
      %v1418 = vadd.f32 %v1386, 1e-05
      %v1419 = vadd.f32 %v1387, 1e-05
      %v1420 = vadd.f32 %v1388, 1e-05
      %v1421 = vadd.f32 %v1389, 1e-05
      %v1422 = vadd.f32 %v1390, 1e-05
      %v1423 = vadd.f32 %v1391, 1e-05
      %v1424 = vadd.f32 %v1392, 1e-05
      %v1425 = vadd.f32 %v1393, 1e-05
      %v1426 = vadd.f32 %v1394, 1e-05
      %v1427 = vadd.f32 %v1395, 1e-05
      %v1428 = vadd.f32 %v1396, 1e-05
      %v1429 = vadd.f32 %v1397, 1e-05
      %v1430 = vadd.f32 %v1398, 1e-05
      %v1431 = vadd.f32 %v1399, 1e-05
      %v1432 = vadd.f32 %v1400, 1e-05
      %v1433 = vadd.f32 %v1401, 1e-05
      %v1434 = vadd.f32 %v1402, 1e-05
      %v1435 = vadd.f32 %v1403, 1e-05
      %v1436 = vadd.f32 %v1404, 1e-05
      %v1437 = vadd.f32 %v1405, 1e-05
      %v1438 = vrsqrt.pop %v1406
      %v1439 = vmul.f32 %v1438, %v1406
      %v1440 = vmul.f32 %v1439, %v1438
      %v1441 = vmul.f32 0.5, %v1440
      %v1442 = vsub.f32 1.5, %v1441
      %v1443 = vmul.f32 %v1438, %v1442
      %v1444 = vmul.f32 %v1406, %v1443
      %vm1445 = vcmp.eq.f32.partialorder %v1406, inf
      %v1446 = vsel %vm1445, %v1406, %v1444
      %vm1447 = vcmp.eq.f32.partialorder %v1406, 0.0
      %v1448 = vand.u32 %v1406, 2147483648
      %v1449 = vsel %vm1447, %v1448, %v1446
      %v1450 = vrsqrt.pop %v1407
      %v1451 = vmul.f32 %v1450, %v1407
      %v1452 = vmul.f32 %v1451, %v1450
      %v1453 = vmul.f32 0.5, %v1452
      %v1454 = vsub.f32 1.5, %v1453
      %v1455 = vmul.f32 %v1450, %v1454
      %v1456 = vmul.f32 %v1407, %v1455
      %vm1457 = vcmp.eq.f32.partialorder %v1407, inf
      %v1458 = vsel %vm1457, %v1407, %v1456
      %vm1459 = vcmp.eq.f32.partialorder %v1407, 0.0
      %v1460 = vand.u32 %v1407, 2147483648
      %v1461 = vsel %vm1459, %v1460, %v1458
      %v1462 = vrsqrt.pop %v1408
      %v1463 = vmul.f32 %v1462, %v1408
      %v1464 = vmul.f32 %v1463, %v1462
      %v1465 = vmul.f32 0.5, %v1464
      %v1466 = vsub.f32 1.5, %v1465
      %v1467 = vmul.f32 %v1462, %v1466
      %v1468 = vmul.f32 %v1408, %v1467
      %vm1469 = vcmp.eq.f32.partialorder %v1408, inf
      %v1470 = vsel %vm1469, %v1408, %v1468
      %vm1471 = vcmp.eq.f32.partialorder %v1408, 0.0
      %v1472 = vand.u32 %v1408, 2147483648
      %v1473 = vsel %vm1471, %v1472, %v1470
      %v1474 = vrsqrt.pop %v1409
      %v1475 = vmul.f32 %v1474, %v1409
      %v1476 = vmul.f32 %v1475, %v1474
      %v1477 = vmul.f32 0.5, %v1476
      %v1478 = vsub.f32 1.5, %v1477
      %v1479 = vmul.f32 %v1474, %v1478
      %v1480 = vmul.f32 %v1409, %v1479
      %vm1481 = vcmp.eq.f32.partialorder %v1409, inf
      %v1482 = vsel %vm1481, %v1409, %v1480
      %vm1483 = vcmp.eq.f32.partialorder %v1409, 0.0
      %v1484 = vand.u32 %v1409, 2147483648
      %v1485 = vsel %vm1483, %v1484, %v1482
      %v1486 = vrsqrt.pop %v1410
      %v1487 = vmul.f32 %v1486, %v1410
      %v1488 = vmul.f32 %v1487, %v1486
      %v1489 = vmul.f32 0.5, %v1488
      %v1490 = vsub.f32 1.5, %v1489
      %v1491 = vmul.f32 %v1486, %v1490
      %v1492 = vmul.f32 %v1410, %v1491
      %vm1493 = vcmp.eq.f32.partialorder %v1410, inf
      %v1494 = vsel %vm1493, %v1410, %v1492
      %vm1495 = vcmp.eq.f32.partialorder %v1410, 0.0
      %v1496 = vand.u32 %v1410, 2147483648
      %v1497 = vsel %vm1495, %v1496, %v1494
      %v1498 = vrsqrt.pop %v1411
      %v1499 = vmul.f32 %v1498, %v1411
      %v1500 = vmul.f32 %v1499, %v1498
      %v1501 = vmul.f32 0.5, %v1500
      %v1502 = vsub.f32 1.5, %v1501
      %v1503 = vmul.f32 %v1498, %v1502
      %v1504 = vmul.f32 %v1411, %v1503
      %vm1505 = vcmp.eq.f32.partialorder %v1411, inf
      %v1506 = vsel %vm1505, %v1411, %v1504
      %vm1507 = vcmp.eq.f32.partialorder %v1411, 0.0
      %v1508 = vand.u32 %v1411, 2147483648
      %v1509 = vsel %vm1507, %v1508, %v1506
      %v1510 = vrsqrt.pop %v1412
      %v1511 = vmul.f32 %v1510, %v1412
      %v1512 = vmul.f32 %v1511, %v1510
      %v1513 = vmul.f32 0.5, %v1512
      %v1514 = vsub.f32 1.5, %v1513
      %v1515 = vmul.f32 %v1510, %v1514
      %v1516 = vmul.f32 %v1412, %v1515
      %vm1517 = vcmp.eq.f32.partialorder %v1412, inf
      %v1518 = vsel %vm1517, %v1412, %v1516
      %vm1519 = vcmp.eq.f32.partialorder %v1412, 0.0
      %v1520 = vand.u32 %v1412, 2147483648
      %v1521 = vsel %vm1519, %v1520, %v1518
      %v1522 = vrsqrt.pop %v1413
      %v1523 = vmul.f32 %v1522, %v1413
      %v1524 = vmul.f32 %v1523, %v1522
      %v1525 = vmul.f32 0.5, %v1524
      %v1526 = vsub.f32 1.5, %v1525
      %v1527 = vmul.f32 %v1522, %v1526
      %v1528 = vmul.f32 %v1413, %v1527
      %vm1529 = vcmp.eq.f32.partialorder %v1413, inf
      %v1530 = vsel %vm1529, %v1413, %v1528
      %vm1531 = vcmp.eq.f32.partialorder %v1413, 0.0
      %v1532 = vand.u32 %v1413, 2147483648
      %v1533 = vsel %vm1531, %v1532, %v1530
      %v1534 = vrsqrt.pop %v1414
      %v1535 = vmul.f32 %v1534, %v1414
      %v1536 = vmul.f32 %v1535, %v1534
      %v1537 = vmul.f32 0.5, %v1536
      %v1538 = vsub.f32 1.5, %v1537
      %v1539 = vmul.f32 %v1534, %v1538
      %v1540 = vmul.f32 %v1414, %v1539
      %vm1541 = vcmp.eq.f32.partialorder %v1414, inf
      %v1542 = vsel %vm1541, %v1414, %v1540
      %vm1543 = vcmp.eq.f32.partialorder %v1414, 0.0
      %v1544 = vand.u32 %v1414, 2147483648
      %v1545 = vsel %vm1543, %v1544, %v1542
      %v1546 = vrsqrt.pop %v1415
      %v1547 = vmul.f32 %v1546, %v1415
      %v1548 = vmul.f32 %v1547, %v1546
      %v1549 = vmul.f32 0.5, %v1548
      %v1550 = vsub.f32 1.5, %v1549
      %v1551 = vmul.f32 %v1546, %v1550
      %v1552 = vmul.f32 %v1415, %v1551
      %vm1553 = vcmp.eq.f32.partialorder %v1415, inf
      %v1554 = vsel %vm1553, %v1415, %v1552
      %vm1555 = vcmp.eq.f32.partialorder %v1415, 0.0
      %v1556 = vand.u32 %v1415, 2147483648
      %v1557 = vsel %vm1555, %v1556, %v1554
      %v1558 = vrsqrt.pop %v1416
      %v1559 = vmul.f32 %v1558, %v1416
      %v1560 = vmul.f32 %v1559, %v1558
      %v1561 = vmul.f32 0.5, %v1560
      %v1562 = vsub.f32 1.5, %v1561
      %v1563 = vmul.f32 %v1558, %v1562
      %v1564 = vmul.f32 %v1416, %v1563
      %vm1565 = vcmp.eq.f32.partialorder %v1416, inf
      %v1566 = vsel %vm1565, %v1416, %v1564
      %vm1567 = vcmp.eq.f32.partialorder %v1416, 0.0
      %v1568 = vand.u32 %v1416, 2147483648
      %v1569 = vsel %vm1567, %v1568, %v1566
      %v1570 = vrsqrt.pop %v1417
      %v1571 = vmul.f32 %v1570, %v1417
      %v1572 = vmul.f32 %v1571, %v1570
      %v1573 = vmul.f32 0.5, %v1572
      %v1574 = vsub.f32 1.5, %v1573
      %v1575 = vmul.f32 %v1570, %v1574
      %v1576 = vmul.f32 %v1417, %v1575
      %vm1577 = vcmp.eq.f32.partialorder %v1417, inf
      %v1578 = vsel %vm1577, %v1417, %v1576
      %vm1579 = vcmp.eq.f32.partialorder %v1417, 0.0
      %v1580 = vand.u32 %v1417, 2147483648
      %v1581 = vsel %vm1579, %v1580, %v1578
      %v1582 = vrsqrt.pop %v1418
      %v1583 = vmul.f32 %v1582, %v1418
      %v1584 = vmul.f32 %v1583, %v1582
      %v1585 = vmul.f32 0.5, %v1584
      %v1586 = vsub.f32 1.5, %v1585
      %v1587 = vmul.f32 %v1582, %v1586
      %v1588 = vmul.f32 %v1418, %v1587
      %vm1589 = vcmp.eq.f32.partialorder %v1418, inf
      %v1590 = vsel %vm1589, %v1418, %v1588
      %vm1591 = vcmp.eq.f32.partialorder %v1418, 0.0
      %v1592 = vand.u32 %v1418, 2147483648
      %v1593 = vsel %vm1591, %v1592, %v1590
      %v1594 = vrsqrt.pop %v1419
      %v1595 = vmul.f32 %v1594, %v1419
      %v1596 = vmul.f32 %v1595, %v1594
      %v1597 = vmul.f32 0.5, %v1596
      %v1598 = vsub.f32 1.5, %v1597
      %v1599 = vmul.f32 %v1594, %v1598
      %v1600 = vmul.f32 %v1419, %v1599
      %vm1601 = vcmp.eq.f32.partialorder %v1419, inf
      %v1602 = vsel %vm1601, %v1419, %v1600
      %vm1603 = vcmp.eq.f32.partialorder %v1419, 0.0
      %v1604 = vand.u32 %v1419, 2147483648
      %v1605 = vsel %vm1603, %v1604, %v1602
      %v1606 = vrsqrt.pop %v1420
      %v1607 = vmul.f32 %v1606, %v1420
      %v1608 = vmul.f32 %v1607, %v1606
      %v1609 = vmul.f32 0.5, %v1608
      %v1610 = vsub.f32 1.5, %v1609
      %v1611 = vmul.f32 %v1606, %v1610
      %v1612 = vmul.f32 %v1420, %v1611
      %vm1613 = vcmp.eq.f32.partialorder %v1420, inf
      %v1614 = vsel %vm1613, %v1420, %v1612
      %vm1615 = vcmp.eq.f32.partialorder %v1420, 0.0
      %v1616 = vand.u32 %v1420, 2147483648
      %v1617 = vsel %vm1615, %v1616, %v1614
      %v1618 = vrsqrt.pop %v1421
      %v1619 = vmul.f32 %v1618, %v1421
      %v1620 = vmul.f32 %v1619, %v1618
      %v1621 = vmul.f32 0.5, %v1620
      %v1622 = vsub.f32 1.5, %v1621
      %v1623 = vmul.f32 %v1618, %v1622
      %v1624 = vmul.f32 %v1421, %v1623
      %vm1625 = vcmp.eq.f32.partialorder %v1421, inf
      %v1626 = vsel %vm1625, %v1421, %v1624
      %vm1627 = vcmp.eq.f32.partialorder %v1421, 0.0
      %v1628 = vand.u32 %v1421, 2147483648
      %v1629 = vsel %vm1627, %v1628, %v1626
      %v1630 = vrsqrt.pop %v1422
      %v1631 = vmul.f32 %v1630, %v1422
      %v1632 = vmul.f32 %v1631, %v1630
      %v1633 = vmul.f32 0.5, %v1632
      %v1634 = vsub.f32 1.5, %v1633
      %v1635 = vmul.f32 %v1630, %v1634
      %v1636 = vmul.f32 %v1422, %v1635
      %vm1637 = vcmp.eq.f32.partialorder %v1422, inf
      %v1638 = vsel %vm1637, %v1422, %v1636
      %vm1639 = vcmp.eq.f32.partialorder %v1422, 0.0
      %v1640 = vand.u32 %v1422, 2147483648
      %v1641 = vsel %vm1639, %v1640, %v1638
      %v1642 = vrsqrt.pop %v1423
      %v1643 = vmul.f32 %v1642, %v1423
      %v1644 = vmul.f32 %v1643, %v1642
      %v1645 = vmul.f32 0.5, %v1644
      %v1646 = vsub.f32 1.5, %v1645
      %v1647 = vmul.f32 %v1642, %v1646
      %v1648 = vmul.f32 %v1423, %v1647
      %vm1649 = vcmp.eq.f32.partialorder %v1423, inf
      %v1650 = vsel %vm1649, %v1423, %v1648
      %vm1651 = vcmp.eq.f32.partialorder %v1423, 0.0
      %v1652 = vand.u32 %v1423, 2147483648
      %v1653 = vsel %vm1651, %v1652, %v1650
      %v1654 = vrsqrt.pop %v1424
      %v1655 = vmul.f32 %v1654, %v1424
      %v1656 = vmul.f32 %v1655, %v1654
      %v1657 = vmul.f32 0.5, %v1656
      %v1658 = vsub.f32 1.5, %v1657
      %v1659 = vmul.f32 %v1654, %v1658
      %v1660 = vmul.f32 %v1424, %v1659
      %vm1661 = vcmp.eq.f32.partialorder %v1424, inf
      %v1662 = vsel %vm1661, %v1424, %v1660
      %vm1663 = vcmp.eq.f32.partialorder %v1424, 0.0
      %v1664 = vand.u32 %v1424, 2147483648
      %v1665 = vsel %vm1663, %v1664, %v1662
      %v1666 = vrsqrt.pop %v1425
      %v1667 = vmul.f32 %v1666, %v1425
      %v1668 = vmul.f32 %v1667, %v1666
      %v1669 = vmul.f32 0.5, %v1668
      %v1670 = vsub.f32 1.5, %v1669
      %v1671 = vmul.f32 %v1666, %v1670
      %v1672 = vmul.f32 %v1425, %v1671
      %vm1673 = vcmp.eq.f32.partialorder %v1425, inf
      %v1674 = vsel %vm1673, %v1425, %v1672
      %vm1675 = vcmp.eq.f32.partialorder %v1425, 0.0
      %v1676 = vand.u32 %v1425, 2147483648
      %v1677 = vsel %vm1675, %v1676, %v1674
      %v1678 = vrsqrt.pop %v1426
      %v1679 = vmul.f32 %v1678, %v1426
      %v1680 = vmul.f32 %v1679, %v1678
      %v1681 = vmul.f32 0.5, %v1680
      %v1682 = vsub.f32 1.5, %v1681
      %v1683 = vmul.f32 %v1678, %v1682
      %v1684 = vmul.f32 %v1426, %v1683
      %vm1685 = vcmp.eq.f32.partialorder %v1426, inf
      %v1686 = vsel %vm1685, %v1426, %v1684
      %vm1687 = vcmp.eq.f32.partialorder %v1426, 0.0
      %v1688 = vand.u32 %v1426, 2147483648
      %v1689 = vsel %vm1687, %v1688, %v1686
      %v1690 = vrsqrt.pop %v1427
      %v1691 = vmul.f32 %v1690, %v1427
      %v1692 = vmul.f32 %v1691, %v1690
      %v1693 = vmul.f32 0.5, %v1692
      %v1694 = vsub.f32 1.5, %v1693
      %v1695 = vmul.f32 %v1690, %v1694
      %v1696 = vmul.f32 %v1427, %v1695
      %vm1697 = vcmp.eq.f32.partialorder %v1427, inf
      %v1698 = vsel %vm1697, %v1427, %v1696
      %vm1699 = vcmp.eq.f32.partialorder %v1427, 0.0
      %v1700 = vand.u32 %v1427, 2147483648
      %v1701 = vsel %vm1699, %v1700, %v1698
      %v1702 = vrsqrt.pop %v1428
      %v1703 = vmul.f32 %v1702, %v1428
      %v1704 = vmul.f32 %v1703, %v1702
      %v1705 = vmul.f32 0.5, %v1704
      %v1706 = vsub.f32 1.5, %v1705
      %v1707 = vmul.f32 %v1702, %v1706
      %v1708 = vmul.f32 %v1428, %v1707
      %vm1709 = vcmp.eq.f32.partialorder %v1428, inf
      %v1710 = vsel %vm1709, %v1428, %v1708
      %vm1711 = vcmp.eq.f32.partialorder %v1428, 0.0
      %v1712 = vand.u32 %v1428, 2147483648
      %v1713 = vsel %vm1711, %v1712, %v1710
      %v1714 = vrsqrt.pop %v1429
      %v1715 = vmul.f32 %v1714, %v1429
      %v1716 = vmul.f32 %v1715, %v1714
      %v1717 = vmul.f32 0.5, %v1716
      %v1718 = vsub.f32 1.5, %v1717
      %v1719 = vmul.f32 %v1714, %v1718
      %v1720 = vmul.f32 %v1429, %v1719
      %vm1721 = vcmp.eq.f32.partialorder %v1429, inf
      %v1722 = vsel %vm1721, %v1429, %v1720
      %vm1723 = vcmp.eq.f32.partialorder %v1429, 0.0
      %v1724 = vand.u32 %v1429, 2147483648
      %v1725 = vsel %vm1723, %v1724, %v1722
      %v1726 = vrsqrt.pop %v1430
      %v1727 = vmul.f32 %v1726, %v1430
      %v1728 = vmul.f32 %v1727, %v1726
      %v1729 = vmul.f32 0.5, %v1728
      %v1730 = vsub.f32 1.5, %v1729
      %v1731 = vmul.f32 %v1726, %v1730
      %v1732 = vmul.f32 %v1430, %v1731
      %vm1733 = vcmp.eq.f32.partialorder %v1430, inf
      %v1734 = vsel %vm1733, %v1430, %v1732
      %vm1735 = vcmp.eq.f32.partialorder %v1430, 0.0
      %v1736 = vand.u32 %v1430, 2147483648
      %v1737 = vsel %vm1735, %v1736, %v1734
      %v1738 = vrsqrt.pop %v1431
      %v1739 = vmul.f32 %v1738, %v1431
      %v1740 = vmul.f32 %v1739, %v1738
      %v1741 = vmul.f32 0.5, %v1740
      %v1742 = vsub.f32 1.5, %v1741
      %v1743 = vmul.f32 %v1738, %v1742
      %v1744 = vmul.f32 %v1431, %v1743
      %vm1745 = vcmp.eq.f32.partialorder %v1431, inf
      %v1746 = vsel %vm1745, %v1431, %v1744
      %vm1747 = vcmp.eq.f32.partialorder %v1431, 0.0
      %v1748 = vand.u32 %v1431, 2147483648
      %v1749 = vsel %vm1747, %v1748, %v1746
      %v1750 = vrsqrt.pop %v1432
      %v1751 = vmul.f32 %v1750, %v1432
      %v1752 = vmul.f32 %v1751, %v1750
      %v1753 = vmul.f32 0.5, %v1752
      %v1754 = vsub.f32 1.5, %v1753
      %v1755 = vmul.f32 %v1750, %v1754
      %v1756 = vmul.f32 %v1432, %v1755
      %vm1757 = vcmp.eq.f32.partialorder %v1432, inf
      %v1758 = vsel %vm1757, %v1432, %v1756
      %vm1759 = vcmp.eq.f32.partialorder %v1432, 0.0
      %v1760 = vand.u32 %v1432, 2147483648
      %v1761 = vsel %vm1759, %v1760, %v1758
      %v1762 = vrsqrt.pop %v1433
      %v1763 = vmul.f32 %v1762, %v1433
      %v1764 = vmul.f32 %v1763, %v1762
      %v1765 = vmul.f32 0.5, %v1764
      %v1766 = vsub.f32 1.5, %v1765
      %v1767 = vmul.f32 %v1762, %v1766
      %v1768 = vmul.f32 %v1433, %v1767
      %vm1769 = vcmp.eq.f32.partialorder %v1433, inf
      %v1770 = vsel %vm1769, %v1433, %v1768
      %vm1771 = vcmp.eq.f32.partialorder %v1433, 0.0
      %v1772 = vand.u32 %v1433, 2147483648
      %v1773 = vsel %vm1771, %v1772, %v1770
      %v1774 = vrsqrt.pop %v1434
      %v1775 = vmul.f32 %v1774, %v1434
      %v1776 = vmul.f32 %v1775, %v1774
      %v1777 = vmul.f32 0.5, %v1776
      %v1778 = vsub.f32 1.5, %v1777
      %v1779 = vmul.f32 %v1774, %v1778
      %v1780 = vmul.f32 %v1434, %v1779
      %vm1781 = vcmp.eq.f32.partialorder %v1434, inf
      %v1782 = vsel %vm1781, %v1434, %v1780
      %vm1783 = vcmp.eq.f32.partialorder %v1434, 0.0
      %v1784 = vand.u32 %v1434, 2147483648
      %v1785 = vsel %vm1783, %v1784, %v1782
      %v1786 = vrsqrt.pop %v1435
      %v1787 = vmul.f32 %v1786, %v1435
      %v1788 = vmul.f32 %v1787, %v1786
      %v1789 = vmul.f32 0.5, %v1788
      %v1790 = vsub.f32 1.5, %v1789
      %v1791 = vmul.f32 %v1786, %v1790
      %v1792 = vmul.f32 %v1435, %v1791
      %vm1793 = vcmp.eq.f32.partialorder %v1435, inf
      %v1794 = vsel %vm1793, %v1435, %v1792
      %vm1795 = vcmp.eq.f32.partialorder %v1435, 0.0
      %v1796 = vand.u32 %v1435, 2147483648
      %v1797 = vsel %vm1795, %v1796, %v1794
      %v1798 = vrsqrt.pop %v1436
      %v1799 = vmul.f32 %v1798, %v1436
      %v1800 = vmul.f32 %v1799, %v1798
      %v1801 = vmul.f32 0.5, %v1800
      %v1802 = vsub.f32 1.5, %v1801
      %v1803 = vmul.f32 %v1798, %v1802
      %v1804 = vmul.f32 %v1436, %v1803
      %vm1805 = vcmp.eq.f32.partialorder %v1436, inf
      %v1806 = vsel %vm1805, %v1436, %v1804
      %vm1807 = vcmp.eq.f32.partialorder %v1436, 0.0
      %v1808 = vand.u32 %v1436, 2147483648
      %v1809 = vsel %vm1807, %v1808, %v1806
      %v1810 = vrsqrt.pop %v1437
      %v1811 = vmul.f32 %v1810, %v1437
      %v1812 = vmul.f32 %v1811, %v1810
      %v1813 = vmul.f32 0.5, %v1812
      %v1814 = vsub.f32 1.5, %v1813
      %v1815 = vmul.f32 %v1810, %v1814
      %v1816 = vmul.f32 %v1437, %v1815
      %vm1817 = vcmp.eq.f32.partialorder %v1437, inf
      %v1818 = vsel %vm1817, %v1437, %v1816
      %vm1819 = vcmp.eq.f32.partialorder %v1437, 0.0
      %v1820 = vand.u32 %v1437, 2147483648
      %v1821 = vsel %vm1819, %v1820, %v1818
      %vm1854 = vcmask 1041409
      %v1855 = vsel %vm1854, %v575, %v574
      %vm1856 = vcmask 1042434
      %v1857 = vsel %vm1856, %v576, %v1855
      %vm1858 = vcmask 1043459
      %v1859 = vsel %vm1858, %v577, %v1857
      %vm1860 = vcmask 1044484
      %v1861 = vsel %vm1860, %v578, %v1859
      %vm1862 = vcmask 1045509
      %v1863 = vsel %vm1862, %v579, %v1861
      %vm1864 = vcmask 1046534
      %v1865 = vsel %vm1864, %v580, %v1863
      %vm1866 = vcmask 1047559
      %v1867 = vsel %vm1866, %v581, %v1865
      %v1868 = vsel %vm1854, %v583, %v582
      %v1869 = vsel %vm1856, %v584, %v1868
      %v1870 = vsel %vm1858, %v585, %v1869
      %v1871 = vsel %vm1860, %v586, %v1870
      %v1872 = vsel %vm1862, %v587, %v1871
      %v1873 = vsel %vm1864, %v588, %v1872
      %v1874 = vsel %vm1866, %v589, %v1873
      %v1875 = vsel %vm1854, %v591, %v590
      %v1876 = vsel %vm1856, %v592, %v1875
      %v1877 = vsel %vm1858, %v593, %v1876
      %v1878 = vsel %vm1860, %v594, %v1877
      %v1879 = vsel %vm1862, %v595, %v1878
      %v1880 = vsel %vm1864, %v596, %v1879
      %v1881 = vsel %vm1866, %v597, %v1880
      %v1882 = vsel %vm1854, %v599, %v598
      %v1883 = vsel %vm1856, %v600, %v1882
      %v1884 = vsel %vm1858, %v601, %v1883
      %v1885 = vsel %vm1860, %v602, %v1884
      %v1886 = vsel %vm1862, %v603, %v1885
      %v1887 = vsel %vm1864, %v604, %v1886
      %v1888 = vsel %vm1866, %v605, %v1887
      %v1925 = vsel %vm1854, %v619, %v612
      %v1926 = vsel %vm1856, %v626, %v1925
      %v1927 = vsel %vm1858, %v633, %v1926
      %v1928 = vsel %vm1860, %v640, %v1927
      %v1929 = vsel %vm1862, %v647, %v1928
      %v1930 = vsel %vm1864, %v654, %v1929
      %v1931 = vsel %vm1866, %v661, %v1930
      %v1932 = vsel %vm1854, %v675, %v668
      %v1933 = vsel %vm1856, %v682, %v1932
      %v1934 = vsel %vm1858, %v689, %v1933
      %v1935 = vsel %vm1860, %v696, %v1934
      %v1936 = vsel %vm1862, %v703, %v1935
      %v1937 = vsel %vm1864, %v710, %v1936
      %v1938 = vsel %vm1866, %v717, %v1937
      %v1939 = vsel %vm1854, %v731, %v724
      %v1940 = vsel %vm1856, %v738, %v1939
      %v1941 = vsel %vm1858, %v745, %v1940
      %v1942 = vsel %vm1860, %v752, %v1941
      %v1943 = vsel %vm1862, %v759, %v1942
      %v1944 = vsel %vm1864, %v766, %v1943
      %v1945 = vsel %vm1866, %v773, %v1944
      %v1946 = vsel %vm1854, %v787, %v780
      %v1947 = vsel %vm1856, %v794, %v1946
      %v1948 = vsel %vm1858, %v801, %v1947
      %v1949 = vsel %vm1860, %v808, %v1948
      %v1950 = vsel %vm1862, %v815, %v1949
      %v1951 = vsel %vm1864, %v822, %v1950
      %v1952 = vsel %vm1866, %v829, %v1951
      %1953 = vrot.lane.b32.xlu0 %v1931, 32
      %v1954 = vpop.permute.xlu0 %1953
      %1955 = vrot.lane.b32.xlu0 %v1938, 32
      %v1956 = vpop.permute.xlu0 %1955
      %1957 = vrot.lane.b32.xlu0 %v1945, 32
      %v1958 = vpop.permute.xlu0 %1957
      %1959 = vrot.lane.b32.xlu0 %v1952, 32
      %v1960 = vpop.permute.xlu0 %1959
      %v1997 = vsel %vm1854, %v843, %v836
      %v1998 = vsel %vm1856, %v850, %v1997
      %v1999 = vsel %vm1858, %v857, %v1998
      %v2000 = vsel %vm1860, %v864, %v1999
      %v2001 = vsel %vm1862, %v871, %v2000
      %v2002 = vsel %vm1864, %v878, %v2001
      %v2003 = vsel %vm1866, %v885, %v2002
      %v2004 = vsel %vm1854, %v899, %v892
      %v2005 = vsel %vm1856, %v906, %v2004
      %v2006 = vsel %vm1858, %v913, %v2005
      %v2007 = vsel %vm1860, %v920, %v2006
      %v2008 = vsel %vm1862, %v927, %v2007
      %v2009 = vsel %vm1864, %v934, %v2008
      %v2010 = vsel %vm1866, %v941, %v2009
      %v2011 = vsel %vm1854, %v955, %v948
      %v2012 = vsel %vm1856, %v962, %v2011
      %v2013 = vsel %vm1858, %v969, %v2012
      %v2014 = vsel %vm1860, %v976, %v2013
      %v2015 = vsel %vm1862, %v983, %v2014
      %v2016 = vsel %vm1864, %v990, %v2015
      %v2017 = vsel %vm1866, %v997, %v2016
      %v2018 = vsel %vm1854, %v1011, %v1004
      %v2019 = vsel %vm1856, %v1018, %v2018
      %v2020 = vsel %vm1858, %v1025, %v2019
      %v2021 = vsel %vm1860, %v1032, %v2020
      %v2022 = vsel %vm1862, %v1039, %v2021
      %v2023 = vsel %vm1864, %v1046, %v2022
      %v2024 = vsel %vm1866, %v1053, %v2023
      %2025 = vrot.lane.b32.xlu0 %v2003, 64
      %v2026 = vpop.permute.xlu0 %2025
      %2027 = vrot.lane.b32.xlu0 %v2010, 64
      %v2028 = vpop.permute.xlu0 %2027
      %2029 = vrot.lane.b32.xlu0 %v2017, 64
      %v2030 = vpop.permute.xlu0 %2029
      %2031 = vrot.lane.b32.xlu0 %v2024, 64
      %v2032 = vpop.permute.xlu0 %2031
      %v2069 = vsel %vm1854, %v1461, %v1449
      %v2070 = vsel %vm1856, %v1473, %v2069
      %v2071 = vsel %vm1858, %v1485, %v2070
      %v2072 = vsel %vm1860, %v1497, %v2071
      %v2073 = vsel %vm1862, %v1509, %v2072
      %v2074 = vsel %vm1864, %v1521, %v2073
      %v2075 = vsel %vm1866, %v1533, %v2074
      %v2076 = vsel %vm1854, %v1557, %v1545
      %v2077 = vsel %vm1856, %v1569, %v2076
      %v2078 = vsel %vm1858, %v1581, %v2077
      %v2079 = vsel %vm1860, %v1593, %v2078
      %v2080 = vsel %vm1862, %v1605, %v2079
      %v2081 = vsel %vm1864, %v1617, %v2080
      %v2082 = vsel %vm1866, %v1629, %v2081
      %v2083 = vsel %vm1854, %v1653, %v1641
      %v2084 = vsel %vm1856, %v1665, %v2083
      %v2085 = vsel %vm1858, %v1677, %v2084
      %v2086 = vsel %vm1860, %v1689, %v2085
      %v2087 = vsel %vm1862, %v1701, %v2086
      %v2088 = vsel %vm1864, %v1713, %v2087
      %v2089 = vsel %vm1866, %v1725, %v2088
      %v2090 = vsel %vm1854, %v1749, %v1737
      %v2091 = vsel %vm1856, %v1761, %v2090
      %v2092 = vsel %vm1858, %v1773, %v2091
      %v2093 = vsel %vm1860, %v1785, %v2092
      %v2094 = vsel %vm1862, %v1797, %v2093
      %v2095 = vsel %vm1864, %v1809, %v2094
      %v2096 = vsel %vm1866, %v1821, %v2095
      %2097 = vrot.lane.b32.xlu0 %v2075, 96
      %v2098 = vpop.permute.xlu0 %2097
      %2099 = vrot.lane.b32.xlu0 %v2082, 96
      %v2100 = vpop.permute.xlu0 %2099
      %2101 = vrot.lane.b32.xlu0 %v2089, 96
      %v2102 = vpop.permute.xlu0 %2101
      %2103 = vrot.lane.b32.xlu0 %v2096, 96
      %v2104 = vpop.permute.xlu0 %2103
      %v2109 = vsel %vm342, %v1867, %v1954
      %v2110 = vsel %vm342, %v1874, %v1956
      %v2111 = vsel %vm342, %v1881, %v1958
      %v2112 = vsel %vm342, %v1888, %v1960
      %vm2113 = vcmask 523264
      %v2114 = vsel %vm2113, %v2109, %v2026
      %v2115 = vsel %vm2113, %v2110, %v2028
      %v2116 = vsel %vm2113, %v2111, %v2030
      %v2117 = vsel %vm2113, %v2112, %v2032
      %vm2118 = vcmask 785408
      %v2119 = vsel %vm2118, %v2114, %v2098
      %v2120 = vsel %vm2118, %v2115, %v2100
      %v2121 = vsel %vm2118, %v2116, %v2102
      %v2122 = vsel %vm2118, %v2117, %v2104
      %v2123 = vadd.f32 %v338, 1.0
      %v2124 = vadd.f32 %v339, 1.0
      %v2125 = vadd.f32 %v340, 1.0
      %v2126 = vadd.f32 %v341, 1.0
      %v2127 = vlog2.pop %v2123
      %v2128 = vmul.f32 %v2127, 0.6931472
      %v2129 = vlog2.pop %v2124
      %v2130 = vmul.f32 %v2129, 0.6931472
      %v2131 = vlog2.pop %v2125
      %v2132 = vmul.f32 %v2131, 0.6931472
      %v2133 = vlog2.pop %v2126
      %v2134 = vmul.f32 %v2133, 0.6931472
      %v2135 = vstv %s305
      %v2136 = vrcp.pop %v2135
      %v2137 = vmul.f32 %v2135, %v2136
      %v2138 = vsub.f32 1.0, %v2137
      %v2139 = vmul.f32 %v2136, %v2138
      %v2140 = vadd.f32 %v2136, %v2139
      %vm2141 = vweird.f32 %v2135
      %vm2142 = vweird.f32 %v2136
      %vm2143 = vmor %vm2141, %vm2142
      %v2144 = vsel %vm2143, %v2136, %v2140
      %v2145 = vand.u32 2147483647, %v2135
      %vm2146 = vcmp.eq.f32.partialorder %v2145, 8.507059e+37
      %v2147 = vand.u32 %v2135, 2147483648
      %v2148 = vor.u32 1.1754944e-38, %v2147
      %v2149 = vsel %vm2146, %v2148, %v2144
      %v2150 = vmul.f32 %v2128, %v2149
      %v2151 = vmul.f32 %v2130, %v2149
      %v2152 = vmul.f32 %v2132, %v2149
      %v2153 = vmul.f32 %v2134, %v2149
      %v2154 = vrcp.pop %v2128
      %v2155 = vmul.f32 %v2128, %v2154
      %v2156 = vsub.f32 1.0, %v2155
      %v2157 = vmul.f32 %v2154, %v2156
      %v2158 = vadd.f32 %v2154, %v2157
      %vm2159 = vweird.f32 %v2128
      %vm2160 = vweird.f32 %v2154
      %vm2161 = vmor %vm2159, %vm2160
      %v2162 = vsel %vm2161, %v2154, %v2158
      %v2163 = vand.u32 2147483647, %v2128
      %vm2164 = vcmp.eq.f32.partialorder %v2163, 8.507059e+37
      %v2165 = vand.u32 %v2128, 2147483648
      %v2166 = vor.u32 1.1754944e-38, %v2165
      %v2167 = vsel %vm2164, %v2166, %v2162
      %v2168 = vrcp.pop %v2130
      %v2169 = vmul.f32 %v2130, %v2168
      %v2170 = vsub.f32 1.0, %v2169
      %v2171 = vmul.f32 %v2168, %v2170
      %v2172 = vadd.f32 %v2168, %v2171
      %vm2173 = vweird.f32 %v2130
      %vm2174 = vweird.f32 %v2168
      %vm2175 = vmor %vm2173, %vm2174
      %v2176 = vsel %vm2175, %v2168, %v2172
      %v2177 = vand.u32 2147483647, %v2130
      %vm2178 = vcmp.eq.f32.partialorder %v2177, 8.507059e+37
      %v2179 = vand.u32 %v2130, 2147483648
      %v2180 = vor.u32 1.1754944e-38, %v2179
      %v2181 = vsel %vm2178, %v2180, %v2176
      %v2182 = vrcp.pop %v2132
      %v2183 = vmul.f32 %v2132, %v2182
      %v2184 = vsub.f32 1.0, %v2183
      %v2185 = vmul.f32 %v2182, %v2184
      %v2186 = vadd.f32 %v2182, %v2185
      %vm2187 = vweird.f32 %v2132
      %vm2188 = vweird.f32 %v2182
      %vm2189 = vmor %vm2187, %vm2188
      %v2190 = vsel %vm2189, %v2182, %v2186
      %v2191 = vand.u32 2147483647, %v2132
      %vm2192 = vcmp.eq.f32.partialorder %v2191, 8.507059e+37
      %v2193 = vand.u32 %v2132, 2147483648
      %v2194 = vor.u32 1.1754944e-38, %v2193
      %v2195 = vsel %vm2192, %v2194, %v2190
      %v2196 = vrcp.pop %v2134
      %v2197 = vmul.f32 %v2134, %v2196
      %v2198 = vsub.f32 1.0, %v2197
      %v2199 = vmul.f32 %v2196, %v2198
      %v2200 = vadd.f32 %v2196, %v2199
      %vm2201 = vweird.f32 %v2134
      %vm2202 = vweird.f32 %v2196
      %vm2203 = vmor %vm2201, %vm2202
      %v2204 = vsel %vm2203, %v2196, %v2200
      %v2205 = vand.u32 2147483647, %v2134
      %vm2206 = vcmp.eq.f32.partialorder %v2205, 8.507059e+37
      %v2207 = vand.u32 %v2134, 2147483648
      %v2208 = vor.u32 1.1754944e-38, %v2207
      %v2209 = vsel %vm2206, %v2208, %v2204
      %v2210 = vmul.f32 %v2135, %v2167
      %v2211 = vmul.f32 %v2135, %v2181
      %v2212 = vmul.f32 %v2135, %v2195
      %v2213 = vmul.f32 %v2135, %v2209
      %v2214 = vld [vmem:[%s4] sm:$0x1]
      %v2215 = vld [vmem:[%s3] sm:$0xff]
      %v2216 = vld [vmem:[%s3 + $0x8] sm:$0xff]
      %v2217 = vld [vmem:[%s3 + $0x10] sm:$0xff]
      %v2218 = vld [vmem:[%s3 + $0x18] sm:$0xff]
      %v2219 = vld [vmem:[%s3 + $0x20] sm:$0xff]
      %v2220 = vld [vmem:[%s3 + $0x28] sm:$0xff]
      %v2221 = vld [vmem:[%s3 + $0x30] sm:$0xff]
      %v2222 = vld [vmem:[%s3 + $0x38] sm:$0xff]
      %v2223 = vld [vmem:[%s3 + $0x40] sm:$0xff]
      %v2224 = vld [vmem:[%s3 + $0x48] sm:$0xff]
      %v2225 = vld [vmem:[%s3 + $0x50] sm:$0xff]
      %v2226 = vld [vmem:[%s3 + $0x58] sm:$0xff]
      %v2227 = vld [vmem:[%s3 + $0x60] sm:$0xff]
      %v2228 = vld [vmem:[%s3 + $0x68] sm:$0xff]
      %v2229 = vld [vmem:[%s3 + $0x70] sm:$0xff]
      %v2230 = vld [vmem:[%s3 + $0x78] sm:$0xff]
      %v2231 = vld [vmem:[%s3 + $0x80] sm:$0xff]
      %v2232 = vld [vmem:[%s3 + $0x88] sm:$0xff]
      %v2233 = vld [vmem:[%s3 + $0x90] sm:$0xff]
      %v2234 = vld [vmem:[%s3 + $0x98] sm:$0xff]
      %v2235 = vld [vmem:[%s3 + $0xa0] sm:$0xff]
      %v2236 = vld [vmem:[%s3 + $0xa8] sm:$0xff]
      %v2237 = vld [vmem:[%s3 + $0xb0] sm:$0xff]
      %v2238 = vld [vmem:[%s3 + $0xb8] sm:$0xff]
      %v2239 = vld [vmem:[%s3 + $0xc0] sm:$0xff]
      %v2240 = vld [vmem:[%s3 + $0xc8] sm:$0xff]
      %v2241 = vld [vmem:[%s3 + $0xd0] sm:$0xff]
      %v2242 = vld [vmem:[%s3 + $0xd8] sm:$0xff]
      %v2243 = vld [vmem:[%s3 + $0xe0] sm:$0xff]
      %v2244 = vld [vmem:[%s3 + $0xe8] sm:$0xff]
      %v2245 = vld [vmem:[%s3 + $0xf0] sm:$0xff]
      %v2246 = vld [vmem:[%s3 + $0xf8] sm:$0xff]
      %2247 = vmatpush.msra.mxu0 %v2246
      %2248 = vmatpush.msra.mxu0 %v2245
      %2249 = vmatpush.msra.mxu0 %v2244
      %2250 = vmatpush.msra.mxu0 %v2243
      %2251 = vmatpush.msra.mxu0 %v2242
      %2252 = vmatpush.msra.mxu0 %v2241
      %2253 = vmatpush.msra.mxu0 %v2240
      %2254 = vmatpush.msra.mxu0 %v2239
      %2255 = vmatpush.msra.mxu0 %v2238
      %2256 = vmatpush.msra.mxu0 %v2237
      %2257 = vmatpush.msra.mxu0 %v2236
      %2258 = vmatpush.msra.mxu0 %v2235
      %2259 = vmatpush.msra.mxu0 %v2234
      %2260 = vmatpush.msra.mxu0 %v2233
      %2261 = vmatpush.msra.mxu0 %v2232
      %2262 = vmatpush.msra.mxu0 %v2231
      %2263 = vmatmul.f32.gmra.mxu0 %v2119
      %v2264 = vpop.f32.mrf.mxu0
      %v2265 = vadd.f32 0.0, %v2264
      %2266 = vmatmul.f32.gmra.mxu0 %v2120
      %v2267 = vpop.f32.mrf.mxu0
      %v2268 = vadd.f32 0.0, %v2267
      %2269 = vmatmul.f32.gmra.mxu0 %v2121
      %v2270 = vpop.f32.mrf.mxu0
      %v2271 = vadd.f32 0.0, %v2270
      %2272 = vmatmul.f32.gmra.mxu0 %v2122
      %v2273 = vpop.f32.mrf.mxu0
      %v2274 = vadd.f32 0.0, %v2273
      %2275 = vdwg.mxu0
      %2277 = vset.pattern.permute.xlu0 0
      %2278 = vperm.xlu0 %2277, %v2150
      %v2279 = vpop.permute.xlu0 %2278
      %2282 = vset.pattern.permute.xlu0 0
      %2283 = vperm.xlu0 %2282, %v2151
      %v2284 = vpop.permute.xlu0 %2283
      %2287 = vset.pattern.permute.xlu0 0
      %2288 = vperm.xlu0 %2287, %v2152
      %v2289 = vpop.permute.xlu0 %2288
      %2292 = vset.pattern.permute.xlu0 0
      %2293 = vperm.xlu0 %2292, %v2153
      %v2294 = vpop.permute.xlu0 %2293
      %v2296 = vmul.f32 %v2279, %v2265
      %v2297 = vmul.f32 %v2284, %v2268
      %v2298 = vmul.f32 %v2289, %v2271
      %v2299 = vmul.f32 %v2294, %v2274
      %2300 = vmatpush.msra.mxu0 %v2230
      %2301 = vmatpush.msra.mxu0 %v2229
      %2302 = vmatpush.msra.mxu0 %v2228
      %2303 = vmatpush.msra.mxu0 %v2227
      %2304 = vmatpush.msra.mxu0 %v2226
      %2305 = vmatpush.msra.mxu0 %v2225
      %2306 = vmatpush.msra.mxu0 %v2224
      %2307 = vmatpush.msra.mxu0 %v2223
      %2308 = vmatpush.msra.mxu0 %v2222
      %2309 = vmatpush.msra.mxu0 %v2221
      %2310 = vmatpush.msra.mxu0 %v2220
      %2311 = vmatpush.msra.mxu0 %v2219
      %2312 = vmatpush.msra.mxu0 %v2218
      %2313 = vmatpush.msra.mxu0 %v2217
      %2314 = vmatpush.msra.mxu0 %v2216
      %2315 = vmatpush.msra.mxu0 %v2215
      %2316 = vmatmul.f32.gmra.mxu0 %v2119
      %v2317 = vpop.f32.mrf.mxu0
      %v2318 = vadd.f32 %v2296, %v2317
      %2319 = vmatmul.f32.gmra.mxu0 %v2120
      %v2320 = vpop.f32.mrf.mxu0
      %v2321 = vadd.f32 %v2297, %v2320
      %2322 = vmatmul.f32.gmra.mxu0 %v2121
      %v2323 = vpop.f32.mrf.mxu0
      %v2324 = vadd.f32 %v2298, %v2323
      %2325 = vmatmul.f32.gmra.mxu0 %v2122
      %v2326 = vpop.f32.mrf.mxu0
      %v2327 = vadd.f32 %v2299, %v2326
      %2328 = vdwg.mxu0
      %v2329 = vld [vmem:[%s3 + $0x100] sm:$0xff]
      %v2330 = vld [vmem:[%s3 + $0x108] sm:$0xff]
      %v2331 = vld [vmem:[%s3 + $0x110] sm:$0xff]
      %v2332 = vld [vmem:[%s3 + $0x118] sm:$0xff]
      %v2333 = vld [vmem:[%s3 + $0x120] sm:$0xff]
      %v2334 = vld [vmem:[%s3 + $0x128] sm:$0xff]
      %v2335 = vld [vmem:[%s3 + $0x130] sm:$0xff]
      %v2336 = vld [vmem:[%s3 + $0x138] sm:$0xff]
      %v2337 = vld [vmem:[%s3 + $0x140] sm:$0xff]
      %v2338 = vld [vmem:[%s3 + $0x148] sm:$0xff]
      %v2339 = vld [vmem:[%s3 + $0x150] sm:$0xff]
      %v2340 = vld [vmem:[%s3 + $0x158] sm:$0xff]
      %v2341 = vld [vmem:[%s3 + $0x160] sm:$0xff]
      %v2342 = vld [vmem:[%s3 + $0x168] sm:$0xff]
      %v2343 = vld [vmem:[%s3 + $0x170] sm:$0xff]
      %v2344 = vld [vmem:[%s3 + $0x178] sm:$0xff]
      %2345 = vmatpush.msra.mxu0 %v2344
      %2346 = vmatpush.msra.mxu0 %v2343
      %2347 = vmatpush.msra.mxu0 %v2342
      %2348 = vmatpush.msra.mxu0 %v2341
      %2349 = vmatpush.msra.mxu0 %v2340
      %2350 = vmatpush.msra.mxu0 %v2339
      %2351 = vmatpush.msra.mxu0 %v2338
      %2352 = vmatpush.msra.mxu0 %v2337
      %2353 = vmatpush.msra.mxu0 %v2336
      %2354 = vmatpush.msra.mxu0 %v2335
      %2355 = vmatpush.msra.mxu0 %v2334
      %2356 = vmatpush.msra.mxu0 %v2333
      %2357 = vmatpush.msra.mxu0 %v2332
      %2358 = vmatpush.msra.mxu0 %v2331
      %2359 = vmatpush.msra.mxu0 %v2330
      %2360 = vmatpush.msra.mxu0 %v2329
      %2361 = vmatmul.f32.gmra.mxu0 %v2119
      %v2362 = vpop.f32.mrf.mxu0
      %v2363 = vadd.f32 0.0, %v2362
      %2364 = vmatmul.f32.gmra.mxu0 %v2120
      %v2365 = vpop.f32.mrf.mxu0
      %v2366 = vadd.f32 0.0, %v2365
      %2367 = vmatmul.f32.gmra.mxu0 %v2121
      %v2368 = vpop.f32.mrf.mxu0
      %v2369 = vadd.f32 0.0, %v2368
      %2370 = vmatmul.f32.gmra.mxu0 %v2122
      %v2371 = vpop.f32.mrf.mxu0
      %v2372 = vadd.f32 0.0, %v2371
      %2373 = vdwg.mxu0
      %2375 = vset.pattern.permute.xlu0 0
      %2376 = vperm.xlu0 %2375, %v2210
      %v2377 = vpop.permute.xlu0 %2376
      %2380 = vset.pattern.permute.xlu0 0
      %2381 = vperm.xlu0 %2380, %v2211
      %v2382 = vpop.permute.xlu0 %2381
      %2385 = vset.pattern.permute.xlu0 0
      %2386 = vperm.xlu0 %2385, %v2212
      %v2387 = vpop.permute.xlu0 %2386
      %2390 = vset.pattern.permute.xlu0 0
      %2391 = vperm.xlu0 %2390, %v2213
      %v2392 = vpop.permute.xlu0 %2391
      %v2394 = vmul.f32 %v2377, %v2363
      %v2395 = vmul.f32 %v2382, %v2366
      %v2396 = vmul.f32 %v2387, %v2369
      %v2397 = vmul.f32 %v2392, %v2372
      %v2398 = vadd.f32 %v2318, %v2394
      %v2399 = vadd.f32 %v2321, %v2395
      %v2400 = vadd.f32 %v2324, %v2396
      %v2401 = vadd.f32 %v2327, %v2397
      %v2403 = vperm.slane %v2214, 0
      %v2405 = vadd.f32 %v2398, %v2403
      %v2406 = vadd.f32 %v2399, %v2403
      %v2407 = vadd.f32 %v2400, %v2403
      %v2408 = vadd.f32 %v2401, %v2403
      %v2409 = vmax.f32 %v2405, 0.0
      %v2410 = vmax.f32 %v2406, 0.0
      %v2411 = vmax.f32 %v2407, 0.0
      %v2412 = vmax.f32 %v2408, 0.0
      %v2413 = vld [vmem:[%s5] sm:$0xff]
      %v2414 = vld [vmem:[%s5 + $0x8] sm:$0xff]
      %v2415 = vld [vmem:[%s5 + $0x10] sm:$0xff]
      %v2416 = vld [vmem:[%s5 + $0x18] sm:$0xff]
      %v2417 = vld [vmem:[%s6] sm:$0x1]
      %v2419 = vperm.slane %v2417, 0
      %v2422 = vsel %vm342, %v2409, 0
      %v2425 = vsel %vm342, %v2410, 0
      %v2428 = vsel %vm342, %v2411, 0
      %v2431 = vsel %vm342, %v2412, 0
      %2433 = vmatpush.msra.mxu0 0.0
      %2434 = vmatpush.msra.mxu0 0.0
      %2435 = vmatpush.msra.mxu0 0.0
      %2436 = vmatpush.msra.mxu0 0.0
      %2437 = vmatpush.msra.mxu0 0.0
      %2438 = vmatpush.msra.mxu0 0.0
      %2439 = vmatpush.msra.mxu0 0.0
      %2440 = vmatpush.msra.mxu0 0.0
      %2441 = vmatpush.msra.mxu0 0.0
      %2442 = vmatpush.msra.mxu0 0.0
      %2443 = vmatpush.msra.mxu0 0.0
      %2444 = vmatpush.msra.mxu0 0.0
      %2445 = vmatpush.msra.mxu0 %v2416
      %2446 = vmatpush.msra.mxu0 %v2415
      %2447 = vmatpush.msra.mxu0 %v2414
      %2448 = vmatpush.msra.mxu0 %v2413
      %2449 = vmatmul.f32.gmra.mxu0 %v2422
      %v2450 = vpop.f32.mrf.mxu0
      %v2451 = vadd.f32 %v2419, %v2450
      %2452 = vmatmul.f32.gmra.mxu0 %v2425
      %v2453 = vpop.f32.mrf.mxu0
      %v2454 = vadd.f32 %v2419, %v2453
      %2455 = vmatmul.f32.gmra.mxu0 %v2428
      %v2456 = vpop.f32.mrf.mxu0
      %v2457 = vadd.f32 %v2419, %v2456
      %2458 = vmatmul.f32.gmra.mxu0 %v2431
      %v2459 = vpop.f32.mrf.mxu0
      %v2460 = vadd.f32 %v2419, %v2459
      %2461 = vdwg.mxu0
      %2462 = vst.msk [vmem:[%s303] sm:$0xff] %vm342, %v2451
      %2463 = vst.msk [vmem:[%s303 + $0x8] sm:$0xff] %vm342, %v2454
      %2464 = vst.msk [vmem:[%s303 + $0x10] sm:$0xff] %vm342, %v2457
      %2465 = vst.msk [vmem:[%s303 + $0x18] sm:$0xff] %vm342, %v2460
      %s2466 = smul.u32 4, %s19
      %p2467 = scmp.lt.s32.totalorder %s2466, 7
      %s2468 = scalar_select %p2467, %s2466, 7
      %s2469 = smul.addr %s2468, 8
      %s2470 = scalar_lea.vmem %s7, %s2469
      // Predicated region
      $region49: #{tpu_custom_call.1} parent=47 // pred_check
        %p2471 = pneg %p194
      $region50: #{tpu_custom_call.1} parent=47 // pred_check_branch
        %2473 = sbr.rel (%p2471) target = $region52
      $region51: #{tpu_custom_call.1} parent=47 // pred_region
        %s2474 = smul.u32 4, %s19
      $region52: #{tpu_custom_call.1} parent=47 // pred_fallthru
        _
    $region48: #{tpu_custom_call.1} parent=5 // pred_fallthru
      _
    %p2475 = scmp.le.s32.totalorder 2, %s14
    // Predicated region
    $region53: #{tpu_custom_call.1} parent=5 // pred_check
      %p2476 = pneg %p2475
    $region54: #{tpu_custom_call.1} parent=5 // pred_check_branch
      %2478 = sbr.rel (%p2476) target = $region56
    $region55: #{tpu_custom_call.1} parent=5 // pred_region
      %s2479 = ssub.s32 %s14, 2
      // Predicated region
      $region57: #{tpu_custom_call.1} parent=55 // pred_check
        %p2480 = pneg %p200
      $region58: #{tpu_custom_call.1} parent=55 // pred_check_branch
        %2482 = sbr.rel (%p2480) target = $region60
      $region59: #{tpu_custom_call.1} parent=55 // pred_region
        %s2483 = smul.u32 4, %s20
        %p2484 = scmp.lt.s32.totalorder %s2483, 7
        %s2485 = scalar_select %p2484, %s2483, 7
        %s2486 = smul.addr %s2485, 8
        %s2487 = scalar_lea.vmem %s7, %s2486
      $region60: #{tpu_custom_call.1} parent=55 // pred_fallthru
        _
    $region56: #{tpu_custom_call.1} parent=5 // pred_fallthru
      _
  $region6: #{tpu_custom_call.1} parent=0 // loop_footer
    %s18 = sadd.s32 1, %s14
  $region7: #{tpu_custom_call.1} parent=0 // loop_footer_branch
    %13 = sbr.rel target = $region3
  $region8: #{tpu_custom_call.1} parent=0 // loop_exit
    _

</llo_original>
